<compile_context>
chip_gen: v7x
topology: tpu7x:2x2x1
jax: 0.10.0
libtpu: 0.0.40
codegen_flags: <defaults>
</compile_context>

<pallas_src>
import jax
import jax.numpy as jnp
from jax.experimental import pallas as pl
from jax.experimental.pallas import tpu as pltpu


def _round_up(x, m):
    return (x + m - 1) // m * m


# ----------------------------------------------------------------------------
# Conv 3x3 (stride 1, pad 1) + bias + ReLU
# ----------------------------------------------------------------------------
def _conv3x3_relu_kernel(x_ref, w_ref, b_ref, o_ref, xpad_ref):
    # x_ref   : (1, H, W, Cin)      bf16  whole image (VMEM-resident across j, r)
    # w_ref   : (3, 3*Cin, TCout)   bf16  taps flattened along (dx, Cin)
    # b_ref   : (1, TCout)          f32
    # o_ref   : (1, TH, W, TCout)   bf16  one row chunk of one Cout tile
    # xpad_ref: (H+3, Wp, Cin)      bf16  zero-padded image scratch
    H, W, Cin = x_ref.shape[1], x_ref.shape[2], x_ref.shape[3]
    Wp = xpad_ref.shape[1]
    TH = o_ref.shape[1]
    TCout = o_ref.shape[3]
    mc = TH * Wp

    j = pl.program_id(1)   # Cout tile   ("arbitrary")
    r = pl.program_id(2)   # row chunk   ("arbitrary")

    # Build the padded image once per image: zero only the border / overhang,
    # then one bulk copy of the interior.
    @pl.when(jnp.logical_and(j == 0, r == 0))
    def _build_padded():
        dt = xpad_ref.dtype
        xpad_ref[0:1] = jnp.zeros((1, Wp, Cin), dt)                          # top pad row
        xpad_ref[H + 1:H + 3] = jnp.zeros((2, Wp, Cin), dt)                  # bottom pad + overhang
        xpad_ref[:, 0:1, :] = jnp.zeros((H + 3, 1, Cin), dt)                 # left pad col
        xpad_ref[:, W + 1:Wp, :] = jnp.zeros((H + 3, Wp - W - 1, Cin), dt)   # right pad cols
        xpad_ref[1:H + 1, 1:W + 1, :] = x_ref[0]                             # interior (bulk copy)

    bias = b_ref[...]          # (1, TCout) f32, loaded once
    r0 = r * TH

    acc = None
    for dy in range(3):
        # Rows [r0+dy, r0+dy+TH] of the padded image; the extra row covers the
        # flat-index overhang of the dx=1,2 taps (only feeds dropped columns).
        blk = xpad_ref[pl.ds(r0 + dy, TH + 1), :, :]          # (TH+1, Wp, Cin)
        flat = blk.reshape((TH + 1) * Wp, Cin)                # Wp % 8 == 0 -> clean reshape
        if Cin <= 128:
            # im2col along dx: one fat K=3*Cin matmul per dy.
            patch = jnp.concatenate(
                [flat[0:mc], flat[1:mc + 1], flat[2:mc + 2]], axis=-1)
            contrib = jnp.dot(patch, w_ref[dy],
                              preferred_element_type=jnp.float32)
            acc = contrib if acc is None else acc + contrib
        else:
            # K = Cin >= 256 already saturates the MXU contraction dim.
            for dx in range(3):
                contrib = jnp.dot(flat[dx:dx + mc],
                                  w_ref[dy, dx * Cin:(dx + 1) * Cin, :],
                                  preferred_element_type=jnp.float32)
                acc = contrib if acc is None else acc + contrib

    y = jnp.maximum(acc + bias, 0.0).astype(o_ref.dtype)      # (mc, TCout)
    # Drop the Wp - W pad/garbage columns with one aligned bulk store.
    o_ref[0] = y.reshape(TH, Wp, TCout)[:, :W, :]


def conv3x3_relu(x, w, b):
    """x: (B, H, W, Cin) bf16; w: (3, 3, Cin, Cout); b: (Cout,) f32."""
    B, H, W, Cin = x.shape
    Cout = w.shape[-1]
    TCout = min(Cout, 256)          # NOTE: 128 is a better choice on v5e (128x128 MXU)
    if Cout % TCout:
        TCout = Cout
    n_j = Cout // TCout

    Wp = _round_up(W + 2, 8)        # sublane-aligned padded row width
    # Row-chunk height: keep the f32 accumulator (TH*Wp, TCout) <= ~192 KB and
    # make TH divide H so every output block is full.
    TH = max(1, min(H, (192 * 1024) // (4 * TCout * Wp)))
    while H % TH:
        TH -= 1
    n_r = H // TH

    w_flat = w.reshape(3, 3 * Cin, Cout).astype(x.dtype)
    b2 = b.reshape(1, Cout).astype(jnp.float32)

    return pl.pallas_call(
        _conv3x3_relu_kernel,
        out_shape=jax.ShapeDtypeStruct((B, H, W, Cout), x.dtype),
        grid=(B, n_j, n_r),
        in_specs=[
            # whole image, constant block index across (j, r) -> fetched once per image
            pl.BlockSpec((1, H, W, Cin), lambda n, j, r: (n, 0, 0, 0)),
            # weight tile, constant across the inner row-chunk axis -> reused
            pl.BlockSpec((3, 3 * Cin, TCout), lambda n, j, r: (0, 0, j)),
            pl.BlockSpec((1, TCout), lambda n, j, r: (0, j)),
        ],
        out_specs=pl.BlockSpec((1, TH, W, TCout), lambda n, j, r: (n, r, 0, j)),
        scratch_shapes=[pltpu.VMEM((H + 3, Wp, Cin), x.dtype)],
        compiler_params=pltpu.CompilerParams(
            # j and r must be "arbitrary": the padded-image scratch is built at
            # (j == 0, r == 0) and reused across both axes.
            dimension_semantics=("parallel", "arbitrary", "arbitrary"),
            vmem_limit_bytes=48 * 1024 * 1024,
        ),
    )(x, w_flat, b2)


# ----------------------------------------------------------------------------
# MaxPool 2x2 stride 2
# ----------------------------------------------------------------------------
def _maxpool2x2_kernel(x_ref, o_ref):
    # x_ref: (1, THp, 2, Wo, 2*C) ; o_ref: (1, THp, Wo, C)
    C = o_ref.shape[3]
    v = jnp.maximum(x_ref[0, :, 0, :, :], x_ref[0, :, 1, :, :])   # vertical max
    o_ref[0] = jnp.maximum(v[:, :, :C], v[:, :, C:])              # horizontal max


def maxpool2x2(x):
    """x: (B, H, W, C) with H, W even -> (B, H//2, W//2, C)."""
    B, H, W, C = x.shape
    Ho, Wo = H // 2, W // 2
    # Free row-major reshape: pair up adjacent rows and adjacent-column channel groups.
    x5 = x.reshape(B, Ho, 2, Wo, 2 * C)
    # Large (~1 MiB) blocks so the memory-bound pool runs near HBM roofline.
    bytes_per_row = 2 * Wo * 2 * C * x.dtype.itemsize
    THp = max(1, min(Ho, (1 << 20) // max(1, bytes_per_row)))
    while Ho % THp:
        THp -= 1
    return pl.pallas_call(
        _maxpool2x2_kernel,
        out_shape=jax.ShapeDtypeStruct((B, Ho, Wo, C), x.dtype),
        grid=(B, Ho // THp),
        in_specs=[pl.BlockSpec((1, THp, 2, Wo, 2 * C),
                               lambda n, i: (n, i, 0, 0, 0))],
        out_specs=pl.BlockSpec((1, THp, Wo, C), lambda n, i: (n, i, 0, 0)),
        compiler_params=pltpu.CompilerParams(
            dimension_semantics=("parallel", "parallel"),
        ),
    )(x5)


# ----------------------------------------------------------------------------
# VGG16 feature extractor
# ----------------------------------------------------------------------------
_VGG_CFG_MODEL1 = [
    (3, 64), (64, 64), "pool",
    (64, 128), (128, 128), "pool",
    (128, 256), (256, 256), (256, 256), "pool",
    (256, 512), (512, 512), (512, 512),          # relu4_3
]
_VGG_CFG_MODEL2 = [
    "pool",                                      # pool4
    (512, 512), (512, 512), (512, 512),          # relu5_3 (pool5 excluded)
]


def init_params(key):
    # TODO(synk): torchvision pretrained VGG16 weights are not loadable here;
    # use deterministic He-normal init with identical shapes instead.
    params = []
    for cfg in _VGG_CFG_MODEL1 + _VGG_CFG_MODEL2:
        if cfg == "pool":
            continue
        cin, cout = cfg
        key, wk = jax.random.split(key)
        fan_in = 9 * cin
        w = jax.random.normal(wk, (3, 3, cin, cout), jnp.float32) * jnp.sqrt(2.0 / fan_in)
        params.append((w.astype(jnp.bfloat16), jnp.zeros((cout,), jnp.float32)))
    return params


def _run_block(cfgs, params, x, idx):
    for cfg in cfgs:
        if cfg == "pool":
            x = maxpool2x2(x)
        else:
            w, b = params[idx]
            idx += 1
            x = conv3x3_relu(x, w, b)
    return x, idx


def vgg16_forward(params, x_nchw):
    """x_nchw: (B, 3, H, W) like the PyTorch module. Returns (out1, out2) NCHW f32."""
    x = jnp.transpose(x_nchw, (0, 2, 3, 1)).astype(jnp.bfloat16)   # NCHW -> NHWC
    out1_nhwc, idx = _run_block(_VGG_CFG_MODEL1, params, x, 0)
    out2_nhwc, _ = _run_block(_VGG_CFG_MODEL2, params, out1_nhwc, idx)
    out1 = jnp.transpose(out1_nhwc, (0, 3, 1, 2)).astype(jnp.float32)
    out2 = jnp.transpose(out2_nhwc, (0, 3, 1, 2)).astype(jnp.float32)
    return out1, out2


if __name__ == "__main__":
    key = jax.random.PRNGKey(0)
    k_p, k_x, k_c1, k_w1, k_c2, k_w2, k_m = jax.random.split(key, 7)

    # --- unit check 1: conv (im2col path, Cin<=128, row-chunked grid) -------
    xc = jax.random.normal(k_c1, (2, 16, 16, 16), jnp.float32).astype(jnp.bfloat16)
    wc = (jax.random.normal(k_w1, (3, 3, 16, 256), jnp.float32) * 0.1).astype(jnp.bfloat16)
    bc = jnp.linspace(-0.5, 0.5, 256, dtype=jnp.float32)
    got = conv3x3_relu(xc, wc, bc).astype(jnp.float32)
    ref = jax.lax.conv_general_dilated(
        xc.astype(jnp.float32), wc.astype(jnp.float32), (1, 1), "SAME",
        dimension_numbers=("NHWC", "HWIO", "NHWC")) + bc
    ref = jnp.maximum(ref, 0.0)
    rel = jnp.max(jnp.abs(got - ref)) / (jnp.max(jnp.abs(ref)) + 1e-6)
    assert float(rel) < 0.03, float(rel)

    # --- unit check 2: conv (9-tap path, Cin>=256, Cout tiling) -------------
    xc2 = jax.random.normal(k_c2, (1, 8, 8, 256), jnp.float32).astype(jnp.bfloat16)
    wc2 = (jax.random.normal(k_w2, (3, 3, 256, 512), jnp.float32) * 0.02).astype(jnp.bfloat16)
    bc2 = jnp.zeros((512,), jnp.float32)
    got2 = conv3x3_relu(xc2, wc2, bc2).astype(jnp.float32)
    ref2 = jnp.maximum(jax.lax.conv_general_dilated(
        xc2.astype(jnp.float32), wc2.astype(jnp.float32), (1, 1), "SAME",
        dimension_numbers=("NHWC", "HWIO", "NHWC")), 0.0)
    rel2 = jnp.max(jnp.abs(got2 - ref2)) / (jnp.max(jnp.abs(ref2)) + 1e-6)
    assert float(rel2) < 0.03, float(rel2)

    # --- unit check 3: maxpool (exact) ---------------------------------------
    xm = jax.random.normal(k_m, (2, 8, 8, 64), jnp.float32).astype(jnp.bfloat16)
    gotp = maxpool2x2(xm)
    refp = xm.reshape(2, 4, 2, 4, 2, 64).max(axis=(2, 4))
    assert bool(jnp.all(gotp == refp))

    # --- full VGG16 forward --------------------------------------------------
    params = init_params(k_p)
    x = jax.random.normal(k_x, (2, 3, 32, 32), jnp.float32)
    fwd = jax.jit(vgg16_forward)
    out1, out2 = fwd(params, x)
    jax.block_until_ready((out1, out2))

    assert out1.shape == (2, 512, 4, 4), out1.shape   # relu4_3 output
    assert out2.shape == (2, 512, 2, 2), out2.shape   # relu5_3 output
    assert bool(jnp.all(jnp.isfinite(out1))) and bool(jnp.all(jnp.isfinite(out2)))
    print("KERNEL_OK")
</pallas_src>

<mosaic_0001>
module attributes {stable_mosaic.version = 11 : i64} {
  func.func @_conv3x3_relu_kernel(%arg0: i32, %arg1: i32, %arg2: i32, %arg3: memref<1x16x16x16xbf16, #tpu.memory_space<vmem>>, %arg4: memref<3x48x256xbf16, #tpu.memory_space<vmem>>, %arg5: memref<1x256xf32, #tpu.memory_space<vmem>>, %arg6: memref<1x8x16x256xbf16, #tpu.memory_space<vmem>>, %arg7: memref<19x24x16xbf16, #tpu.memory_space<vmem>>) attributes {dimension_semantics = [#tpu.dimension_semantics<parallel>, #tpu.dimension_semantics<arbitrary>, #tpu.dimension_semantics<arbitrary>], iteration_bounds = array<i64: 2, 1, 2>, scalar_prefetch = 0 : i64, scratch_operands = 1 : i64, tpu.core_type = #tpu.core_type<tc>, window_params = [{transform_indices = @transform_0, window_bounds = array<i64: 1, 16, 16, 16>}, {transform_indices = @transform_1, window_bounds = array<i64: 3, 48, 256>}, {transform_indices = @transform_2, window_bounds = array<i64: 1, 256>}, {transform_indices = @transform_3, window_bounds = array<i64: 1, 8, 16, 256>}]} {
    %c0_i32 = arith.constant 0 : i32
    %0 = arith.cmpi eq, %arg1, %c0_i32 : i32
    %c0_i32_0 = arith.constant 0 : i32
    %1 = arith.cmpi eq, %arg2, %c0_i32_0 : i32
    %2 = arith.andi %0, %1 : i1
    %3 = arith.extui %2 : i1 to i32
    %c0_i32_1 = arith.constant 0 : i32
    %4 = arith.cmpi ne, %3, %c0_i32_1 : i32
    scf.if %4 {
      %cst_24 = arith.constant 0.000000e+00 : bf16
      %52 = vector.broadcast %cst_24 : bf16 to vector<1x24x16xbf16>
      %c0_25 = arith.constant 0 : index
      %c0_26 = arith.constant 0 : index
      %c0_27 = arith.constant 0 : index
      %53 = vector.load %arg7[%c0_25, %c0_26, %c0_27] : memref<19x24x16xbf16, #tpu.memory_space<vmem>>, vector<1x24x16xbf16>
      tpu.vector_store %arg7[%c0_25, %c0_26, %c0_27], %52 {strides = array<i32>} : memref<19x24x16xbf16, #tpu.memory_space<vmem>>, vector<1x24x16xbf16>,
      %cst_28 = arith.constant 0.000000e+00 : bf16
      %54 = vector.broadcast %cst_28 : bf16 to vector<2x24x16xbf16>
      %c17 = arith.constant 17 : index
      %c0_29 = arith.constant 0 : index
      %c0_30 = arith.constant 0 : index
      %55 = vector.load %arg7[%c17, %c0_29, %c0_30] : memref<19x24x16xbf16, #tpu.memory_space<vmem>>, vector<2x24x16xbf16>
      tpu.vector_store %arg7[%c17, %c0_29, %c0_30], %54 {strides = array<i32>} : memref<19x24x16xbf16, #tpu.memory_space<vmem>>, vector<2x24x16xbf16>,
      %cst_31 = arith.constant 0.000000e+00 : bf16
      %56 = vector.broadcast %cst_31 : bf16 to vector<19x1x16xbf16>
      %c0_32 = arith.constant 0 : index
      %c0_33 = arith.constant 0 : index
      %c0_34 = arith.constant 0 : index
      %57 = vector.load %arg7[%c0_32, %c0_33, %c0_34] : memref<19x24x16xbf16, #tpu.memory_space<vmem>>, vector<19x1x16xbf16>
      tpu.vector_store %arg7[%c0_32, %c0_33, %c0_34], %56 {strides = array<i32>} : memref<19x24x16xbf16, #tpu.memory_space<vmem>>, vector<19x1x16xbf16>,
      %cst_35 = arith.constant 0.000000e+00 : bf16
      %58 = vector.broadcast %cst_35 : bf16 to vector<19x7x16xbf16>
      %c0_36 = arith.constant 0 : index
      %c17_37 = arith.constant 17 : index
      %c0_38 = arith.constant 0 : index
      %59 = vector.load %arg7[%c0_36, %c17_37, %c0_38] : memref<19x24x16xbf16, #tpu.memory_space<vmem>>, vector<19x7x16xbf16>
      tpu.vector_store %arg7[%c0_36, %c17_37, %c0_38], %58 {strides = array<i32>} : memref<19x24x16xbf16, #tpu.memory_space<vmem>>, vector<19x7x16xbf16>,
      %c0_39 = arith.constant 0 : index
      %c0_40 = arith.constant 0 : index
      %c0_41 = arith.constant 0 : index
      %c0_42 = arith.constant 0 : index
      %60 = vector.load %arg3[%c0_39, %c0_40, %c0_41, %c0_42] : memref<1x16x16x16xbf16, #tpu.memory_space<vmem>>, vector<1x16x16x16xbf16>
      %61 = vector.shape_cast %60 : vector<1x16x16x16xbf16> to vector<16x16x16xbf16>
      %c1_43 = arith.constant 1 : index
      %c1_44 = arith.constant 1 : index
      %c0_45 = arith.constant 0 : index
      %62 = vector.load %arg7[%c1_43, %c1_44, %c0_45] : memref<19x24x16xbf16, #tpu.memory_space<vmem>>, vector<16x16x16xbf16>
      tpu.vector_store %arg7[%c1_43, %c1_44, %c0_45], %61 {strides = array<i32>} : memref<19x24x16xbf16, #tpu.memory_space<vmem>>, vector<16x16x16xbf16>,
    } else {
    }
    %c0 = arith.constant 0 : index
    %c0_2 = arith.constant 0 : index
    %5 = vector.load %arg5[%c0, %c0_2] : memref<1x256xf32, #tpu.memory_space<vmem>>, vector<1x256xf32>
    %c8_i32 = arith.constant 8 : i32
    %6 = arith.muli %arg2, %c8_i32 : i32
    %c0_i32_3 = arith.constant 0 : i32
    %7 = arith.addi %6, %c0_i32_3 : i32
    %8 = arith.index_cast %7 : i32 to index
    %c0_4 = arith.constant 0 : index
    %c0_5 = arith.constant 0 : index
    %9 = vector.load %arg7[%8, %c0_4, %c0_5] : memref<19x24x16xbf16, #tpu.memory_space<vmem>>, vector<9x24x16xbf16>
    %10 = vector.shape_cast %9 : vector<9x24x16xbf16> to vector<216x16xbf16>
    %11 = vector.extract_strided_slice %10 {offsets = [0, 0], sizes = [192, 16], strides = [1, 1]} : vector<216x16xbf16> to vector<192x16xbf16>
    %12 = vector.extract_strided_slice %10 {offsets = [1, 0], sizes = [192, 16], strides = [1, 1]} : vector<216x16xbf16> to vector<192x16xbf16>
    %13 = vector.extract_strided_slice %10 {offsets = [2, 0], sizes = [192, 16], strides = [1, 1]} : vector<216x16xbf16> to vector<192x16xbf16>
    %14 = tpu.concatenate %11, %12, %13 in 1 : vector<192x16xbf16>, vector<192x16xbf16>, vector<192x16xbf16> -> vector<192x48xbf16>
    %c0_6 = arith.constant 0 : index
    %c0_7 = arith.constant 0 : index
    %c0_8 = arith.constant 0 : index
    %15 = vector.load %arg4[%c0_6, %c0_7, %c0_8] : memref<3x48x256xbf16, #tpu.memory_space<vmem>>, vector<1x48x256xbf16>
    %16 = vector.shape_cast %15 : vector<1x48x256xbf16> to vector<48x256xbf16>
    %cst = arith.constant dense<0.000000e+00> : vector<192x256xf32>
    %17 = tpu.matmul %14, %16, %cst {dimension_numbers = #tpu.dot_dimension_numbers<[1], [0], [0], [1], [0, 0, 1, 1], [], []>} : vector<192x48xbf16>, vector<48x256xbf16>, vector<192x256xf32> -> vector<192x256xf32>
    %c1_i32 = arith.constant 1 : i32
    %18 = arith.addi %6, %c1_i32 : i32
    %19 = arith.index_cast %18 : i32 to index
    %c0_9 = arith.constant 0 : index
    %c0_10 = arith.constant 0 : index
    %20 = vector.load %arg7[%19, %c0_9, %c0_10] : memref<19x24x16xbf16, #tpu.memory_space<vmem>>, vector<9x24x16xbf16>
    %21 = vector.shape_cast %20 : vector<9x24x16xbf16> to vector<216x16xbf16>
    %22 = vector.extract_strided_slice %21 {offsets = [0, 0], sizes = [192, 16], strides = [1, 1]} : vector<216x16xbf16> to vector<192x16xbf16>
    %23 = vector.extract_strided_slice %21 {offsets = [1, 0], sizes = [192, 16], strides = [1, 1]} : vector<216x16xbf16> to vector<192x16xbf16>
    %24 = vector.extract_strided_slice %21 {offsets = [2, 0], sizes = [192, 16], strides = [1, 1]} : vector<216x16xbf16> to vector<192x16xbf16>
    %25 = tpu.concatenate %22, %23, %24 in 1 : vector<192x16xbf16>, vector<192x16xbf16>, vector<192x16xbf16> -> vector<192x48xbf16>
    %c1 = arith.constant 1 : index
    %c0_11 = arith.constant 0 : index
    %c0_12 = arith.constant 0 : index
    %26 = vector.load %arg4[%c1, %c0_11, %c0_12] : memref<3x48x256xbf16, #tpu.memory_space<vmem>>, vector<1x48x256xbf16>
    %27 = vector.shape_cast %26 : vector<1x48x256xbf16> to vector<48x256xbf16>
    %cst_13 = arith.constant dense<0.000000e+00> : vector<192x256xf32>
    %28 = tpu.matmul %25, %27, %cst_13 {dimension_numbers = #tpu.dot_dimension_numbers<[1], [0], [0], [1], [0, 0, 1, 1], [], []>} : vector<192x48xbf16>, vector<48x256xbf16>, vector<192x256xf32> -> vector<192x256xf32>
    %29 = arith.addf %17, %28 : vector<192x256xf32>
    %c2_i32 = arith.constant 2 : i32
    %30 = arith.addi %6, %c2_i32 : i32
    %31 = arith.index_cast %30 : i32 to index
    %c0_14 = arith.constant 0 : index
    %c0_15 = arith.constant 0 : index
    %32 = vector.load %arg7[%31, %c0_14, %c0_15] : memref<19x24x16xbf16, #tpu.memory_space<vmem>>, vector<9x24x16xbf16>
    %33 = vector.shape_cast %32 : vector<9x24x16xbf16> to vector<216x16xbf16>
    %34 = vector.extract_strided_slice %33 {offsets = [0, 0], sizes = [192, 16], strides = [1, 1]} : vector<216x16xbf16> to vector<192x16xbf16>
    %35 = vector.extract_strided_slice %33 {offsets = [1, 0], sizes = [192, 16], strides = [1, 1]} : vector<216x16xbf16> to vector<192x16xbf16>
    %36 = vector.extract_strided_slice %33 {offsets = [2, 0], sizes = [192, 16], strides = [1, 1]} : vector<216x16xbf16> to vector<192x16xbf16>
    %37 = tpu.concatenate %34, %35, %36 in 1 : vector<192x16xbf16>, vector<192x16xbf16>, vector<192x16xbf16> -> vector<192x48xbf16>
    %c2 = arith.constant 2 : index
    %c0_16 = arith.constant 0 : index
    %c0_17 = arith.constant 0 : index
    %38 = vector.load %arg4[%c2, %c0_16, %c0_17] : memref<3x48x256xbf16, #tpu.memory_space<vmem>>, vector<1x48x256xbf16>
    %39 = vector.shape_cast %38 : vector<1x48x256xbf16> to vector<48x256xbf16>
    %cst_18 = arith.constant dense<0.000000e+00> : vector<192x256xf32>
    %40 = tpu.matmul %37, %39, %cst_18 {dimension_numbers = #tpu.dot_dimension_numbers<[1], [0], [0], [1], [0, 0, 1, 1], [], []>} : vector<192x48xbf16>, vector<48x256xbf16>, vector<192x256xf32> -> vector<192x256xf32>
    %41 = arith.addf %29, %40 : vector<192x256xf32>
    %42 = vector.broadcast %5 : vector<1x256xf32> to vector<192x256xf32>
    %43 = arith.addf %41, %42 : vector<192x256xf32>
    %cst_19 = arith.constant 0.000000e+00 : f32
    %44 = vector.broadcast %cst_19 : f32 to vector<192x256xf32>
    %45 = arith.maximumf %43, %44 : vector<192x256xf32>
    %46 = arith.truncf %45 : vector<192x256xf32> to vector<192x256xbf16>
    %47 = vector.shape_cast %46 : vector<192x256xbf16> to vector<8x24x256xbf16>
    %48 = vector.extract_strided_slice %47 {offsets = [0, 0, 0], sizes = [8, 16, 256], strides = [1, 1, 1]} : vector<8x24x256xbf16> to vector<8x16x256xbf16>
    %c0_20 = arith.constant 0 : index
    %c0_21 = arith.constant 0 : index
    %c0_22 = arith.constant 0 : index
    %c0_23 = arith.constant 0 : index
    %49 = vector.load %arg6[%c0_20, %c0_21, %c0_22, %c0_23] : memref<1x8x16x256xbf16, #tpu.memory_space<vmem>>, vector<1x8x16x256xbf16>
    %50 = vector.shape_cast %49 : vector<1x8x16x256xbf16> to vector<8x16x256xbf16>
    %51 = vector.shape_cast %48 : vector<8x16x256xbf16> to vector<1x8x16x256xbf16>
    tpu.vector_store %arg6[%c0_20, %c0_21, %c0_22, %c0_23], %51 {strides = array<i32>} : memref<1x8x16x256xbf16, #tpu.memory_space<vmem>>, vector<1x8x16x256xbf16>,
    return
  }
  func.func @transform_0(%arg0: i32, %arg1: i32, %arg2: i32) -> (i32, i32, i32, i32) {
    %c0_i32 = arith.constant 0 : i32
    %c0_i32_0 = arith.constant 0 : i32
    %c0_i32_1 = arith.constant 0 : i32
    %c0_i32_2 = arith.constant 0 : i32
    return %arg0, %c0_i32, %c0_i32_0, %c0_i32_1 : i32, i32, i32, i32
  }
  func.func @transform_1(%arg0: i32, %arg1: i32, %arg2: i32) -> (i32, i32, i32) {
    %c0_i32 = arith.constant 0 : i32
    %c0_i32_0 = arith.constant 0 : i32
    %c0_i32_1 = arith.constant 0 : i32
    return %c0_i32, %c0_i32_0, %arg1 : i32, i32, i32
  }
  func.func @transform_2(%arg0: i32, %arg1: i32, %arg2: i32) -> (i32, i32) {
    %c0_i32 = arith.constant 0 : i32
    %c0_i32_0 = arith.constant 0 : i32
    return %c0_i32, %arg1 : i32, i32
  }
  func.func @transform_3(%arg0: i32, %arg1: i32, %arg2: i32) -> (i32, i32, i32, i32) {
    %c0_i32 = arith.constant 0 : i32
    %c0_i32_0 = arith.constant 0 : i32
    return %arg0, %arg2, %c0_i32, %arg1 : i32, i32, i32, i32
  }
}

</mosaic_0001>

<llo_original>
// kernel: tpu_custom_call.1
$region0: #{tpu_custom_call.1}
  #allocation0 [shape = 'u32[]', space=smem, size = 0x4, offset = 0x4, fixed_abs, tag = 'smem constant byte address 0x4 - core index']
  #allocation1 [shape = 'u32[144,128]{1,0:T(1,128)}', space=vmem, size = 0x12000, scoped, tag = 'internal scratch']
  #allocation2 [shape = 'bf16[19,24,16]{2,1,0:T(8,128)(2,1)}', space=vmem, size = 0x1c800, scoped, tag = 'scratch operand']
  %s0 = inlined_call_operand.hbm [shape: bf16[2,16,16,16], index: 0, kind: input, shape index: {}]
  %s1 = inlined_call_operand.hbm [shape: bf16[3,48,256], index: 1, kind: input, shape index: {}]
  %s2 = inlined_call_operand.vmem [shape: f32[1,256], index: 2, kind: input, shape index: {}]
  %s3 = inlined_call_operand.hbm [shape: bf16[2,16,16,256], index: 3, kind: output, shape index: {}]
  %s4 = sld [smem:[#allocation0]]
  $region57: #{tpu_custom_call.1} parent=0
    _
  %s6 = ssub.s32 1, %s4
  %s7 = scalar_select 0, %s6, %s4
  $region1: #{tpu_custom_call.1} parent=0
    #allocation3 [shape = 'u8[131072]{0}', space=vmem, size = 0x20000, scoped, tag = 'input window, operand 0']
    #allocation4 [shape = 's32[2]{0}', space=sflag, size = 0x8, scoped, tag = 'scoped memory for tpu_custom_call.1']
    #allocation5 [shape = 's32[2]{0}', space=sflag, size = 0x8, scoped, tag = 'scoped memory for tpu_custom_call.1']
    #allocation6 [shape = 'u8[73728]{0}', space=vmem, size = 0x12000, scoped, tag = 'input window, operand 1, single buffered']
    #allocation7 [shape = 's32[1]{0}', space=sflag, size = 0x4, scoped, tag = 'scoped memory for tpu_custom_call.1']
    #allocation8 [shape = 'u8[131072]{0}', space=vmem, size = 0x20000, scoped, tag = 'output window, operand 0']
    %8 = vsyncpa [#allocation4], 0
    %s9 = scalar_lea.sflag [#allocation4], 1
    %10 = vsyncpa %s9, 0
    %11 = vsyncpa [#allocation7], 0
    %12 = vsyncpa [#allocation5], 0
    %s13 = scalar_lea.sflag [#allocation5], 1
    %14 = vsyncpa %s13, 0
    loop: start=0, step=1, limit=6
    $region2: #{tpu_custom_call.1} parent=1 // loop_pre_header
      _
    $region3: #{tpu_custom_call.1} parent=1 // loop_header
      %s16 = sphi 0, %s20
      %p17 = scmp.ge.s32.totalorder %s16, 6
      %s23 = sphi 0, %s42
      %s24 = sphi 0, %s38
      %s25 = sphi 0, %s34
      %s26 = sphi 0, %s23
      %s27 = sphi 0, %s24
      %s28 = sphi 0, %s25
      %s29 = sphi 0, %s26
      %s30 = sphi 0, %s27
      %s31 = sphi 0, %s28
      %s45 = sphi 0, %s47
      %s48 = sphi 0, %s45
      %s49 = sphi 0, %s48
      %s65 = sphi 0, %s49
      %s71 = sphi 0, %s73
      %s74 = sphi 0, %s71
      %s75 = sphi 0, %s74
      %s91 = sphi 0, %s75
      %s97 = sphi 0, %s99
      %s100 = sphi 0, %s97
      %s101 = sphi 0, %s100
      %s117 = sphi 0, %s101
      %s127 = sphi 0, %s129
      %s130 = sphi 0, %s127
      %s131 = sphi 0, %s130
      %s147 = sphi 0, %s131
    $region4: #{tpu_custom_call.1} parent=1 // loop_header_branch
      %19 = sbr.rel (%p17) target = $region8
    $region5: #{tpu_custom_call.1} parent=1 // loop_body
      %s21 = ssub.s32 %s16, 1
      %s22 = ssub.s32 %s16, 2
      %s32 = sadd.s32 1, %s25
      %p33 = scmp.ge.s32.totalorder %s32, 2
      %s34 = scalar_select %p33, 0, %s32
      %s35 = sadd.s32 1, %s24
      %s36 = scalar_select %p33, %s35, %s24
      %p37 = scmp.ge.s32.totalorder %s36, 1
      %s38 = scalar_select %p37, 0, %s36
      %s39 = sadd.s32 1, %s23
      %s40 = scalar_select %p37, %s39, %s23
      %p41 = scmp.ge.s32.totalorder %s40, 2
      %s42 = scalar_select %p41, 0, %s40
      %s43 = ssub.s32 %s23, %s42
      %p44 = scmp.eq.s32.totalorder %s43, 0
      %s46 = sadd.s32 %s45, 1
      %s47 = scalar_select %p44, %s45, %s46
      %p50 = pneg %p44
      %p51 = scmp.eq.s32.totalorder %s16, 3
      %p52 = por %p50, %p51
      %p53 = scmp.ne.s32.totalorder %s45, %s48
      %p54 = scmp.eq.s32.totalorder %s16, 0
      %p55 = por %p53, %p54
      %p56 = scmp.ne.s32.totalorder %s45, %s48
      %p57 = scmp.eq.s32.totalorder %s21, 3
      %p58 = por %p56, %p57
      %p59 = scmp.ne.s32.totalorder %s48, %s49
      %p60 = scmp.eq.s32.totalorder %s21, 0
      %p61 = por %p59, %p60
      %p62 = scmp.ne.s32.totalorder %s48, %s49
      %p63 = scmp.eq.s32.totalorder %s22, 3
      %p64 = por %p62, %p63
      %p66 = scmp.ne.s32.totalorder %s49, %s65
      %p67 = scmp.eq.s32.totalorder %s22, 0
      %p68 = por %p66, %p67
      %s69 = ssub.s32 %s24, %s38
      %p70 = scmp.eq.s32.totalorder %s69, 0
      %s72 = sadd.s32 %s71, 1
      %s73 = scalar_select %p70, %s71, %s72
      %p76 = pneg %p70
      %p77 = scmp.eq.s32.totalorder %s16, 3
      %p78 = por %p76, %p77
      %p79 = scmp.ne.s32.totalorder %s71, %s74
      %p80 = scmp.eq.s32.totalorder %s16, 0
      %p81 = por %p79, %p80
      %p82 = scmp.ne.s32.totalorder %s71, %s74
      %p83 = scmp.eq.s32.totalorder %s21, 3
      %p84 = por %p82, %p83
      %p85 = scmp.ne.s32.totalorder %s74, %s75
      %p86 = scmp.eq.s32.totalorder %s21, 0
      %p87 = por %p85, %p86
      %p88 = scmp.ne.s32.totalorder %s74, %s75
      %p89 = scmp.eq.s32.totalorder %s22, 3
      %p90 = por %p88, %p89
      %p92 = scmp.ne.s32.totalorder %s75, %s91
      %p93 = scmp.eq.s32.totalorder %s22, 0
      %p94 = por %p92, %p93
      %s95 = ssub.s32 %s24, %s38
      %p96 = scmp.eq.s32.totalorder %s95, 0
      %s98 = sadd.s32 %s97, 1
      %s99 = scalar_select %p96, %s97, %s98
      %p102 = pneg %p96
      %p103 = scmp.eq.s32.totalorder %s16, 3
      %p104 = por %p102, %p103
      %p105 = scmp.ne.s32.totalorder %s97, %s100
      %p106 = scmp.eq.s32.totalorder %s16, 0
      %p107 = por %p105, %p106
      %p108 = scmp.ne.s32.totalorder %s97, %s100
      %p109 = scmp.eq.s32.totalorder %s21, 3
      %p110 = por %p108, %p109
      %p111 = scmp.ne.s32.totalorder %s100, %s101
      %p112 = scmp.eq.s32.totalorder %s21, 0
      %p113 = por %p111, %p112
      %p114 = scmp.ne.s32.totalorder %s100, %s101
      %p115 = scmp.eq.s32.totalorder %s22, 3
      %p116 = por %p114, %p115
      %p118 = scmp.ne.s32.totalorder %s101, %s117
      %p119 = scmp.eq.s32.totalorder %s22, 0
      %p120 = por %p118, %p119
      %s121 = ssub.s32 %s23, %s42
      %s122 = ssub.s32 %s25, %s34
      %s123 = sor.u32 %s121, %s122
      %s124 = ssub.s32 %s24, %s38
      %s125 = sor.u32 %s123, %s124
      %p126 = scmp.eq.s32.totalorder %s125, 0
      %s128 = sadd.s32 %s127, 1
      %s129 = scalar_select %p126, %s127, %s128
      %p132 = pneg %p126
      %p133 = scmp.eq.s32.totalorder %s16, 3
      %p134 = por %p132, %p133
      %p135 = scmp.ne.s32.totalorder %s127, %s130
      %p136 = scmp.eq.s32.totalorder %s16, 0
      %p137 = por %p135, %p136
      %p138 = scmp.ne.s32.totalorder %s127, %s130
      %p139 = scmp.eq.s32.totalorder %s21, 3
      %p140 = por %p138, %p139
      %p141 = scmp.ne.s32.totalorder %s130, %s131
      %p142 = scmp.eq.s32.totalorder %s21, 0
      %p143 = por %p141, %p142
      %p144 = scmp.ne.s32.totalorder %s130, %s131
      %p145 = scmp.eq.s32.totalorder %s22, 3
      %p146 = por %p144, %p145
      %p148 = scmp.ne.s32.totalorder %s131, %s147
      %p149 = scmp.eq.s32.totalorder %s22, 0
      %p150 = por %p148, %p149
      %p151 = scmp.le.s32.totalorder 1, %s16
      %p152 = scmp.lt.s32.totalorder %s16, 5
      %p153 = pnand %p151, %p152
      %p154 = pneg %p153
      // Predicated region
      $region9: #{tpu_custom_call.1} parent=5 // pred_check
        _
      $region10: #{tpu_custom_call.1} parent=5 // pred_check_branch
        %156 = sbr.rel (%p153) target = $region12
      $region11: #{tpu_custom_call.1} parent=5 // pred_region
        %s157 = ssub.s32 %s16, 1
        // Predicated region
        $region13: #{tpu_custom_call.1} parent=11 // pred_check
          %p158 = pneg %p87
        $region14: #{tpu_custom_call.1} parent=11 // pred_check_branch
          %160 = sbr.rel (%p158) target = $region16
        $region15: #{tpu_custom_call.1} parent=11 // pred_region
          %s161 = smul.u32 2, %s27
          %s163 = ssub.s32 2304, 2304
          %164 = vsyncadd [#allocation7], %s163
          %s165 = smul.addr %s161, 64
          %s166 = scalar_lea.hbm %s1, %s165
          %s167 = sshll.u32 [#allocation6], 4
          %s168 = int_to_ptr.vmem [resolvable:$true] %s167
          %173 = dma.hbm_to_vmem [thread:$0]  %s166, 2304, %s168, [#allocation7], 128, 128, 8
        $region16: #{tpu_custom_call.1} parent=11 // pred_fallthru
          _
        // Predicated region
        $region17: #{tpu_custom_call.1} parent=11 // pred_check
          %p174 = pneg %p113
        $region18: #{tpu_custom_call.1} parent=11 // pred_check_branch
          %176 = sbr.rel (%p174) target = $region20
        $region19: #{tpu_custom_call.1} parent=11 // pred_region
          %s177 = smul.u32 2, %s27
          %p178 = scmp.lt.s32.totalorder %s177, 1
          %s179 = scalar_select %p178, %s177, 1
          %s180 = scalar_lea.vmem %s2, %s179
          %s181 = smul.u32 2, %s27
        $region20: #{tpu_custom_call.1} parent=11 // pred_fallthru
          _
      $region12: #{tpu_custom_call.1} parent=5 // pred_fallthru
        _
      %p182 = scmp.lt.s32.totalorder %s16, 4
      // Predicated region
      $region21: #{tpu_custom_call.1} parent=5 // pred_check
        %p183 = pneg %p182
      $region22: #{tpu_custom_call.1} parent=5 // pred_check_branch
        %185 = sbr.rel (%p183) target = $region24
      $region23: #{tpu_custom_call.1} parent=5 // pred_region
        // Predicated region
        $region25: #{tpu_custom_call.1} parent=23 // pred_check
          %p186 = pneg %p55
        $region26: #{tpu_custom_call.1} parent=23 // pred_check_branch
          %188 = sbr.rel (%p186) target = $region28
        $region27: #{tpu_custom_call.1} parent=23 // pred_region
          %s189 = sand.u32 %s45, 1
          %s190 = scalar_lea.sflag [#allocation4], %s189
          %s191 = sand.u32 %s45, 1
          %s192 = smul.addr %s191, 128
          %s193 = scalar_lea.vmem [#allocation3], %s192
          %s195 = ssub.s32 2048, 2048
          %196 = vsyncadd %s190, %s195
          %s197 = smul.addr %s23, 32
          %s198 = smul.addr %s197, 64
          %s199 = scalar_lea.hbm %s0, %s198
          %s200 = sshll.u32 %s193, 4
          %s201 = int_to_ptr.vmem [resolvable:$true] %s200
          %206 = dma.hbm_to_vmem [thread:$0]  %s199, 2048, %s201, %s190, 64, 64, 4
        $region28: #{tpu_custom_call.1} parent=23 // pred_fallthru
          _
      $region24: #{tpu_custom_call.1} parent=5 // pred_fallthru
        _
      %p207 = scmp.le.s32.totalorder 1, %s16
      %p208 = scmp.lt.s32.totalorder %s16, 5
      %p209 = pnand %p207, %p208
      %p210 = pneg %p209
      // Predicated region
      $region29: #{tpu_custom_call.1} parent=5 // pred_check
        _
      $region30: #{tpu_custom_call.1} parent=5 // pred_check_branch
        %212 = sbr.rel (%p209) target = $region32
      $region31: #{tpu_custom_call.1} parent=5 // pred_region
        %s213 = ssub.s32 %s16, 1
        %s214 = sand.u32 %s48, 1
        %s215 = scalar_lea.sflag [#allocation4], %s214
        %s216 = sand.u32 %s48, 1
        %s217 = smul.addr %s216, 128
        %s218 = scalar_lea.vmem [#allocation3], %s217
        // Predicated region
        $region33: #{tpu_custom_call.1} parent=31 // pred_check
          %p219 = pneg %p61
        $region34: #{tpu_custom_call.1} parent=31 // pred_check_branch
          %221 = sbr.rel (%p219) target = $region36
        $region35: #{tpu_custom_call.1} parent=31 // pred_region
          %222 = dma.done %s215, 2048
        $region36: #{tpu_custom_call.1} parent=31 // pred_fallthru
          _
        // Predicated region
        $region37: #{tpu_custom_call.1} parent=31 // pred_check
          %p223 = pneg %p87
        $region38: #{tpu_custom_call.1} parent=31 // pred_check_branch
          %225 = sbr.rel (%p223) target = $region40
        $region39: #{tpu_custom_call.1} parent=31 // pred_region
          %226 = dma.done [#allocation7], 2304
        $region40: #{tpu_custom_call.1} parent=31 // pred_fallthru
          _
        %s227 = sand.u32 %s48, 1
        %s228 = scalar_lea.sflag [#allocation4], %s227
        %s229 = sand.u32 %s48, 1
        %s230 = smul.addr %s229, 128
        %s231 = scalar_lea.vmem [#allocation3], %s230
        %p232 = pneg %p61
        %p233 = pneg %p58
        %p234 = pneg %p87
        %p235 = pneg %p84
        %s236 = smul.u32 2, %s27
        %p237 = scmp.lt.s32.totalorder %s236, 1
        %s238 = scalar_select %p237, %s236, 1
        %s239 = scalar_lea.vmem %s2, %s238
        %p240 = pneg %p113
        %p241 = pneg %p110
        %p242 = pneg %p143
        %p243 = pneg %p140
        %s244 = sand.u32 %s130, 1
        %s245 = scalar_lea.sflag [#allocation5], %s244
        %s246 = sand.u32 %s130, 1
        %s247 = smul.addr %s246, 128
        %s248 = scalar_lea.vmem [#allocation8], %s247
        %s249 = smul.u32 2, %s27
        %s250 = smul.u32 2, %s27
        %p251 = scmp.lt.s32.totalorder %s250, 1
        %s252 = scalar_select %p251, %s250, 1
        %s253 = scalar_lea.vmem %s2, %s252
        %s254 = smul.u32 2, %s27
        %s255 = smul.u32 8, %s28
        %s256 = smul.u32 2, %s27
        %p258 = scmp.eq.s32.totalorder %s27, 0
        %p259 = scmp.eq.s32.totalorder %s28, 0
        %p260 = pnand %p258, %p259
        %p261 = pneg %p260
        // Predicated region
        $region41: #{tpu_custom_call.1} parent=31 // pred_check
          _
        $region42: #{tpu_custom_call.1} parent=31 // pred_check_branch
          %263 = sbr.rel (%p260) target = $region44
        $region43: #{tpu_custom_call.1} parent=31 // pred_region
          %vm264 = vcmask 125952
          %265 = vst.msk [vmem:[#allocation2] sm:$0xf] %vm264, 0
          %266 = vst.msk [vmem:[#allocation2 + $0x4] sm:$0xf] %vm264, 0
          %267 = vst.msk [vmem:[#allocation2 + $0x8] sm:$0xf] %vm264, 0
          %s268 = scalar_lea.vmem [#allocation2], 204
          %269 = vst.msk [vmem:[%s268] sm:$0xf] %vm264, 0
          %270 = vst.msk [vmem:[%s268 + $0x4] sm:$0xf] %vm264, 0
          %271 = vst.msk [vmem:[%s268 + $0x8] sm:$0xf] %vm264, 0
          %272 = vst.msk [vmem:[%s268 + $0xc] sm:$0xf] %vm264, 0
          %273 = vst.msk [vmem:[%s268 + $0x10] sm:$0xf] %vm264, 0
          %274 = vst.msk [vmem:[%s268 + $0x14] sm:$0xf] %vm264, 0
          %vm275 = vcmask 122880
          %vm276 = vsmask.f32 256
          %vm277 = vmand %vm275, %vm276
          %v278 = vld [vmem:[#allocation2] sm:$0x1]
          %v279 = vsel %vm277, 0, %v278
          %280 = vst [vmem:[#allocation2] sm:$0x1] %v279
          %v281 = vld [vmem:[#allocation2 + $0xc] sm:$0x1]
          %v282 = vsel %vm277, 0, %v281
          %283 = vst [vmem:[#allocation2 + $0xc] sm:$0x1] %v282
          %v284 = vld [vmem:[#allocation2 + $0x18] sm:$0x1]
          %v285 = vsel %vm277, 0, %v284
          %286 = vst [vmem:[#allocation2 + $0x18] sm:$0x1] %v285
          %v287 = vld [vmem:[#allocation2 + $0x24] sm:$0x1]
          %v288 = vsel %vm277, 0, %v287
          %289 = vst [vmem:[#allocation2 + $0x24] sm:$0x1] %v288
          %v290 = vld [vmem:[#allocation2 + $0x30] sm:$0x1]
          %v291 = vsel %vm277, 0, %v290
          %292 = vst [vmem:[#allocation2 + $0x30] sm:$0x1] %v291
          %v293 = vld [vmem:[#allocation2 + $0x3c] sm:$0x1]
          %v294 = vsel %vm277, 0, %v293
          %295 = vst [vmem:[#allocation2 + $0x3c] sm:$0x1] %v294
          %v296 = vld [vmem:[#allocation2 + $0x48] sm:$0x1]
          %v297 = vsel %vm277, 0, %v296
          %298 = vst [vmem:[#allocation2 + $0x48] sm:$0x1] %v297
          %v299 = vld [vmem:[#allocation2 + $0x54] sm:$0x1]
          %v300 = vsel %vm277, 0, %v299
          %301 = vst [vmem:[#allocation2 + $0x54] sm:$0x1] %v300
          %v302 = vld [vmem:[#allocation2 + $0x60] sm:$0x1]
          %v303 = vsel %vm277, 0, %v302
          %304 = vst [vmem:[#allocation2 + $0x60] sm:$0x1] %v303
          %v305 = vld [vmem:[#allocation2 + $0x6c] sm:$0x1]
          %v306 = vsel %vm277, 0, %v305
          %307 = vst [vmem:[#allocation2 + $0x6c] sm:$0x1] %v306
          %v308 = vld [vmem:[#allocation2 + $0x78] sm:$0x1]
          %v309 = vsel %vm277, 0, %v308
          %310 = vst [vmem:[#allocation2 + $0x78] sm:$0x1] %v309
          %v311 = vld [vmem:[#allocation2 + $0x84] sm:$0x1]
          %v312 = vsel %vm277, 0, %v311
          %313 = vst [vmem:[#allocation2 + $0x84] sm:$0x1] %v312
          %v314 = vld [vmem:[#allocation2 + $0x90] sm:$0x1]
          %v315 = vsel %vm277, 0, %v314
          %316 = vst [vmem:[#allocation2 + $0x90] sm:$0x1] %v315
          %v317 = vld [vmem:[#allocation2 + $0x9c] sm:$0x1]
          %v318 = vsel %vm277, 0, %v317
          %319 = vst [vmem:[#allocation2 + $0x9c] sm:$0x1] %v318
          %v320 = vld [vmem:[#allocation2 + $0xa8] sm:$0x1]
          %v321 = vsel %vm277, 0, %v320
          %322 = vst [vmem:[#allocation2 + $0xa8] sm:$0x1] %v321
          %v323 = vld [vmem:[#allocation2 + $0xb4] sm:$0x1]
          %v324 = vsel %vm277, 0, %v323
          %325 = vst [vmem:[#allocation2 + $0xb4] sm:$0x1] %v324
          %v326 = vld [vmem:[#allocation2 + $0xc0] sm:$0x1]
          %v327 = vsel %vm277, 0, %v326
          %328 = vst [vmem:[#allocation2 + $0xc0] sm:$0x1] %v327
          %v329 = vld [vmem:[#allocation2 + $0xcc] sm:$0x1]
          %v330 = vsel %vm277, 0, %v329
          %331 = vst [vmem:[#allocation2 + $0xcc] sm:$0x1] %v330
          %v332 = vld [vmem:[#allocation2 + $0xd8] sm:$0x1]
          %v333 = vsel %vm277, 0, %v332
          %334 = vst [vmem:[#allocation2 + $0xd8] sm:$0x1] %v333
          %vm335 = vcmask 125952
          %vm336 = vsmask.f32 7938
          %vm337 = vmand %vm335, %vm336
          %v338 = vld [vmem:[#allocation2 + $0x8] sm:$0xf]
          %v339 = vsel %vm337, 0, %v338
          %340 = vst [vmem:[#allocation2 + $0x8] sm:$0xf] %v339
          %v341 = vld [vmem:[#allocation2 + $0x14] sm:$0xf]
          %v342 = vsel %vm337, 0, %v341
          %343 = vst [vmem:[#allocation2 + $0x14] sm:$0xf] %v342
          %v344 = vld [vmem:[#allocation2 + $0x20] sm:$0xf]
          %v345 = vsel %vm337, 0, %v344
          %346 = vst [vmem:[#allocation2 + $0x20] sm:$0xf] %v345
          %v347 = vld [vmem:[#allocation2 + $0x2c] sm:$0xf]
          %v348 = vsel %vm337, 0, %v347
          %349 = vst [vmem:[#allocation2 + $0x2c] sm:$0xf] %v348
          %v350 = vld [vmem:[#allocation2 + $0x38] sm:$0xf]
          %v351 = vsel %vm337, 0, %v350
          %352 = vst [vmem:[#allocation2 + $0x38] sm:$0xf] %v351
          %v353 = vld [vmem:[#allocation2 + $0x44] sm:$0xf]
          %v354 = vsel %vm337, 0, %v353
          %355 = vst [vmem:[#allocation2 + $0x44] sm:$0xf] %v354
          %v356 = vld [vmem:[#allocation2 + $0x50] sm:$0xf]
          %v357 = vsel %vm337, 0, %v356
          %358 = vst [vmem:[#allocation2 + $0x50] sm:$0xf] %v357
          %v359 = vld [vmem:[#allocation2 + $0x5c] sm:$0xf]
          %v360 = vsel %vm337, 0, %v359
          %361 = vst [vmem:[#allocation2 + $0x5c] sm:$0xf] %v360
          %v362 = vld [vmem:[#allocation2 + $0x68] sm:$0xf]
          %v363 = vsel %vm337, 0, %v362
          %364 = vst [vmem:[#allocation2 + $0x68] sm:$0xf] %v363
          %v365 = vld [vmem:[#allocation2 + $0x74] sm:$0xf]
          %v366 = vsel %vm337, 0, %v365
          %367 = vst [vmem:[#allocation2 + $0x74] sm:$0xf] %v366
          %v368 = vld [vmem:[#allocation2 + $0x80] sm:$0xf]
          %v369 = vsel %vm337, 0, %v368
          %370 = vst [vmem:[#allocation2 + $0x80] sm:$0xf] %v369
          %v371 = vld [vmem:[#allocation2 + $0x8c] sm:$0xf]
          %v372 = vsel %vm337, 0, %v371
          %373 = vst [vmem:[#allocation2 + $0x8c] sm:$0xf] %v372
          %v374 = vld [vmem:[#allocation2 + $0x98] sm:$0xf]
          %v375 = vsel %vm337, 0, %v374
          %376 = vst [vmem:[#allocation2 + $0x98] sm:$0xf] %v375
          %v377 = vld [vmem:[#allocation2 + $0xa4] sm:$0xf]
          %v378 = vsel %vm337, 0, %v377
          %379 = vst [vmem:[#allocation2 + $0xa4] sm:$0xf] %v378
          %v380 = vld [vmem:[#allocation2 + $0xb0] sm:$0xf]
          %v381 = vsel %vm337, 0, %v380
          %382 = vst [vmem:[#allocation2 + $0xb0] sm:$0xf] %v381
          %v383 = vld [vmem:[#allocation2 + $0xbc] sm:$0xf]
          %v384 = vsel %vm337, 0, %v383
          %385 = vst [vmem:[#allocation2 + $0xbc] sm:$0xf] %v384
          %v386 = vld [vmem:[#allocation2 + $0xc8] sm:$0xf]
          %v387 = vsel %vm337, 0, %v386
          %388 = vst [vmem:[#allocation2 + $0xc8] sm:$0xf] %v387
          %v389 = vld [vmem:[#allocation2 + $0xd4] sm:$0xf]
          %v390 = vsel %vm337, 0, %v389
          %391 = vst [vmem:[#allocation2 + $0xd4] sm:$0xf] %v390
          %v392 = vld [vmem:[#allocation2 + $0xe0] sm:$0xf]
          %v393 = vsel %vm337, 0, %v392
          %394 = vst [vmem:[#allocation2 + $0xe0] sm:$0xf] %v393
          %v395 = vld [vmem:[%s218] sm:$0xf]
          %v396 = vld [vmem:[%s218 + $0x4] sm:$0xf]
          %v397 = vld [vmem:[%s218 + $0x8] sm:$0xf]
          %v398 = vld [vmem:[%s218 + $0xc] sm:$0xf]
          %v399 = vld [vmem:[%s218 + $0x10] sm:$0xf]
          %v400 = vld [vmem:[%s218 + $0x14] sm:$0xf]
          %v401 = vld [vmem:[%s218 + $0x18] sm:$0xf]
          %v402 = vld [vmem:[%s218 + $0x1c] sm:$0xf]
          %v403 = vld [vmem:[%s218 + $0x20] sm:$0xf]
          %v404 = vld [vmem:[%s218 + $0x24] sm:$0xf]
          %v405 = vld [vmem:[%s218 + $0x28] sm:$0xf]
          %v406 = vld [vmem:[%s218 + $0x2c] sm:$0xf]
          %v407 = vld [vmem:[%s218 + $0x30] sm:$0xf]
          %v408 = vld [vmem:[%s218 + $0x34] sm:$0xf]
          %v409 = vld [vmem:[%s218 + $0x38] sm:$0xf]
          %v410 = vld [vmem:[%s218 + $0x3c] sm:$0xf]
          %v411 = vld [vmem:[%s218 + $0x40] sm:$0xf]
          %v412 = vld [vmem:[%s218 + $0x44] sm:$0xf]
          %v413 = vld [vmem:[%s218 + $0x48] sm:$0xf]
          %v414 = vld [vmem:[%s218 + $0x4c] sm:$0xf]
          %v415 = vld [vmem:[%s218 + $0x50] sm:$0xf]
          %v416 = vld [vmem:[%s218 + $0x54] sm:$0xf]
          %v417 = vld [vmem:[%s218 + $0x58] sm:$0xf]
          %v418 = vld [vmem:[%s218 + $0x5c] sm:$0xf]
          %v419 = vld [vmem:[%s218 + $0x60] sm:$0xf]
          %v420 = vld [vmem:[%s218 + $0x64] sm:$0xf]
          %v421 = vld [vmem:[%s218 + $0x68] sm:$0xf]
          %v422 = vld [vmem:[%s218 + $0x6c] sm:$0xf]
          %v423 = vld [vmem:[%s218 + $0x70] sm:$0xf]
          %v424 = vld [vmem:[%s218 + $0x74] sm:$0xf]
          %v425 = vld [vmem:[%s218 + $0x78] sm:$0xf]
          %v426 = vld [vmem:[%s218 + $0x7c] sm:$0xf]
          %vm427 = vsmask.f32 4368
          %vm428 = vmor %vm276, %vm427
          %v430 = vshrl.u32 %v395, 16
          %v432 = vrot.slane %v430, 7
          %v433 = vshll.u32 %v395, 16
          %v435 = vor.u32 %v432, %v433
          %v436 = vrot.slane %v432, 4
          %v438 = vshrl.u32 %v396, 16
          %v440 = vrot.slane %v438, 7
          %v441 = vshll.u32 %v396, 16
          %v443 = vor.u32 %v440, %v441
          %v444 = vsel %vm428, %v436, %v443
          %v445 = vrot.slane %v440, 4
          %v447 = vshrl.u32 %v397, 16
          %v449 = vrot.slane %v447, 7
          %v450 = vshll.u32 %v397, 16
          %v452 = vor.u32 %v449, %v450
          %v453 = vrot.slane %v449, 4
          %v455 = vshrl.u32 %v398, 16
          %v457 = vrot.slane %v455, 7
          %v458 = vshll.u32 %v398, 16
          %v460 = vor.u32 %v457, %v458
          %v461 = vsel %vm428, %v453, %v460
          %v462 = vrot.slane %v457, 4
          %v464 = vshrl.u32 %v399, 16
          %v466 = vrot.slane %v464, 7
          %v467 = vshll.u32 %v399, 16
          %v469 = vor.u32 %v466, %v467
          %v470 = vrot.slane %v466, 4
          %v472 = vshrl.u32 %v400, 16
          %v474 = vrot.slane %v472, 7
          %v475 = vshll.u32 %v400, 16
          %v477 = vor.u32 %v474, %v475
          %v478 = vsel %vm428, %v470, %v477
          %v479 = vrot.slane %v474, 4
          %v481 = vshrl.u32 %v401, 16
          %v483 = vrot.slane %v481, 7
          %v484 = vshll.u32 %v401, 16
          %v486 = vor.u32 %v483, %v484
          %v487 = vrot.slane %v483, 4
          %v489 = vshrl.u32 %v402, 16
          %v491 = vrot.slane %v489, 7
          %v492 = vshll.u32 %v402, 16
          %v494 = vor.u32 %v491, %v492
          %v495 = vsel %vm428, %v487, %v494
          %v496 = vrot.slane %v491, 4
          %v498 = vshrl.u32 %v403, 16
          %v500 = vrot.slane %v498, 7
          %v501 = vshll.u32 %v403, 16
          %v503 = vor.u32 %v500, %v501
          %v504 = vrot.slane %v500, 4
          %v506 = vshrl.u32 %v404, 16
          %v508 = vrot.slane %v506, 7
          %v509 = vshll.u32 %v404, 16
          %v511 = vor.u32 %v508, %v509
          %v512 = vsel %vm428, %v504, %v511
          %v513 = vrot.slane %v508, 4
          %v515 = vshrl.u32 %v405, 16
          %v517 = vrot.slane %v515, 7
          %v518 = vshll.u32 %v405, 16
          %v520 = vor.u32 %v517, %v518
          %v521 = vrot.slane %v517, 4
          %v523 = vshrl.u32 %v406, 16
          %v525 = vrot.slane %v523, 7
          %v526 = vshll.u32 %v406, 16
          %v528 = vor.u32 %v525, %v526
          %v529 = vsel %vm428, %v521, %v528
          %v530 = vrot.slane %v525, 4
          %v532 = vshrl.u32 %v407, 16
          %v534 = vrot.slane %v532, 7
          %v535 = vshll.u32 %v407, 16
          %v537 = vor.u32 %v534, %v535
          %v538 = vrot.slane %v534, 4
          %v540 = vshrl.u32 %v408, 16
          %v542 = vrot.slane %v540, 7
          %v543 = vshll.u32 %v408, 16
          %v545 = vor.u32 %v542, %v543
          %v546 = vsel %vm428, %v538, %v545
          %v547 = vrot.slane %v542, 4
          %v549 = vshrl.u32 %v409, 16
          %v551 = vrot.slane %v549, 7
          %v552 = vshll.u32 %v409, 16
          %v554 = vor.u32 %v551, %v552
          %v555 = vrot.slane %v551, 4
          %v557 = vshrl.u32 %v410, 16
          %v559 = vrot.slane %v557, 7
          %v560 = vshll.u32 %v410, 16
          %v562 = vor.u32 %v559, %v560
          %v563 = vsel %vm428, %v555, %v562
          %v564 = vrot.slane %v559, 4
          %v566 = vshrl.u32 %v411, 16
          %v568 = vrot.slane %v566, 7
          %v569 = vshll.u32 %v411, 16
          %v571 = vor.u32 %v568, %v569
          %v572 = vrot.slane %v568, 4
          %v574 = vshrl.u32 %v412, 16
          %v576 = vrot.slane %v574, 7
          %v577 = vshll.u32 %v412, 16
          %v579 = vor.u32 %v576, %v577
          %v580 = vsel %vm428, %v572, %v579
          %v581 = vrot.slane %v576, 4
          %v583 = vshrl.u32 %v413, 16
          %v585 = vrot.slane %v583, 7
          %v586 = vshll.u32 %v413, 16
          %v588 = vor.u32 %v585, %v586
          %v589 = vrot.slane %v585, 4
          %v591 = vshrl.u32 %v414, 16
          %v593 = vrot.slane %v591, 7
          %v594 = vshll.u32 %v414, 16
          %v596 = vor.u32 %v593, %v594
          %v597 = vsel %vm428, %v589, %v596
          %v598 = vrot.slane %v593, 4
          %v600 = vshrl.u32 %v415, 16
          %v602 = vrot.slane %v600, 7
          %v603 = vshll.u32 %v415, 16
          %v605 = vor.u32 %v602, %v603
          %v606 = vrot.slane %v602, 4
          %v608 = vshrl.u32 %v416, 16
          %v610 = vrot.slane %v608, 7
          %v611 = vshll.u32 %v416, 16
          %v613 = vor.u32 %v610, %v611
          %v614 = vsel %vm428, %v606, %v613
          %v615 = vrot.slane %v610, 4
          %v617 = vshrl.u32 %v417, 16
          %v619 = vrot.slane %v617, 7
          %v620 = vshll.u32 %v417, 16
          %v622 = vor.u32 %v619, %v620
          %v623 = vrot.slane %v619, 4
          %v625 = vshrl.u32 %v418, 16
          %v627 = vrot.slane %v625, 7
          %v628 = vshll.u32 %v418, 16
          %v630 = vor.u32 %v627, %v628
          %v631 = vsel %vm428, %v623, %v630
          %v632 = vrot.slane %v627, 4
          %v634 = vshrl.u32 %v419, 16
          %v636 = vrot.slane %v634, 7
          %v637 = vshll.u32 %v419, 16
          %v639 = vor.u32 %v636, %v637
          %v640 = vrot.slane %v636, 4
          %v642 = vshrl.u32 %v420, 16
          %v644 = vrot.slane %v642, 7
          %v645 = vshll.u32 %v420, 16
          %v647 = vor.u32 %v644, %v645
          %v648 = vsel %vm428, %v640, %v647
          %v649 = vrot.slane %v644, 4
          %v651 = vshrl.u32 %v421, 16
          %v653 = vrot.slane %v651, 7
          %v654 = vshll.u32 %v421, 16
          %v656 = vor.u32 %v653, %v654
          %v657 = vrot.slane %v653, 4
          %v659 = vshrl.u32 %v422, 16
          %v661 = vrot.slane %v659, 7
          %v662 = vshll.u32 %v422, 16
          %v664 = vor.u32 %v661, %v662
          %v665 = vsel %vm428, %v657, %v664
          %v666 = vrot.slane %v661, 4
          %v668 = vshrl.u32 %v423, 16
          %v670 = vrot.slane %v668, 7
          %v671 = vshll.u32 %v423, 16
          %v673 = vor.u32 %v670, %v671
          %v674 = vrot.slane %v670, 4
          %v676 = vshrl.u32 %v424, 16
          %v678 = vrot.slane %v676, 7
          %v679 = vshll.u32 %v424, 16
          %v681 = vor.u32 %v678, %v679
          %v682 = vsel %vm428, %v674, %v681
          %v683 = vrot.slane %v678, 4
          %v685 = vshrl.u32 %v425, 16
          %v687 = vrot.slane %v685, 7
          %v688 = vshll.u32 %v425, 16
          %v690 = vor.u32 %v687, %v688
          %v691 = vrot.slane %v687, 4
          %v693 = vshrl.u32 %v426, 16
          %v695 = vrot.slane %v693, 7
          %v696 = vshll.u32 %v426, 16
          %v698 = vor.u32 %v695, %v696
          %v699 = vsel %vm428, %v691, %v698
          %v700 = vrot.slane %v695, 4
          %s749 = scalar_lea.vmem [#allocation2], 12
          %v750 = vld [vmem:[%s749] sm:$0xf]
          %v751 = vsel %vm337, %v435, %v750
          %752 = vst [vmem:[%s749] sm:$0xf] %v751
          %753 = vst.msk [vmem:[%s749 + $0x4] sm:$0xf] %vm264, %v444
          %v754 = vld [vmem:[%s749 + $0x8] sm:$0x1]
          %v755 = vsel %vm277, %v445, %v754
          %756 = vst [vmem:[%s749 + $0x8] sm:$0x1] %v755
          %v757 = vld [vmem:[%s749 + $0xc] sm:$0xf]
          %v758 = vsel %vm337, %v452, %v757
          %759 = vst [vmem:[%s749 + $0xc] sm:$0xf] %v758
          %760 = vst.msk [vmem:[%s749 + $0x10] sm:$0xf] %vm264, %v461
          %v761 = vld [vmem:[%s749 + $0x14] sm:$0x1]
          %v762 = vsel %vm277, %v462, %v761
          %763 = vst [vmem:[%s749 + $0x14] sm:$0x1] %v762
          %v764 = vld [vmem:[%s749 + $0x18] sm:$0xf]
          %v765 = vsel %vm337, %v469, %v764
          %766 = vst [vmem:[%s749 + $0x18] sm:$0xf] %v765
          %767 = vst.msk [vmem:[%s749 + $0x1c] sm:$0xf] %vm264, %v478
          %v768 = vld [vmem:[%s749 + $0x20] sm:$0x1]
          %v769 = vsel %vm277, %v479, %v768
          %770 = vst [vmem:[%s749 + $0x20] sm:$0x1] %v769
          %v771 = vld [vmem:[%s749 + $0x24] sm:$0xf]
          %v772 = vsel %vm337, %v486, %v771
          %773 = vst [vmem:[%s749 + $0x24] sm:$0xf] %v772
          %774 = vst.msk [vmem:[%s749 + $0x28] sm:$0xf] %vm264, %v495
          %v775 = vld [vmem:[%s749 + $0x2c] sm:$0x1]
          %v776 = vsel %vm277, %v496, %v775
          %777 = vst [vmem:[%s749 + $0x2c] sm:$0x1] %v776
          %v778 = vld [vmem:[%s749 + $0x30] sm:$0xf]
          %v779 = vsel %vm337, %v503, %v778
          %780 = vst [vmem:[%s749 + $0x30] sm:$0xf] %v779
          %781 = vst.msk [vmem:[%s749 + $0x34] sm:$0xf] %vm264, %v512
          %v782 = vld [vmem:[%s749 + $0x38] sm:$0x1]
          %v783 = vsel %vm277, %v513, %v782
          %784 = vst [vmem:[%s749 + $0x38] sm:$0x1] %v783
          %v785 = vld [vmem:[%s749 + $0x3c] sm:$0xf]
          %v786 = vsel %vm337, %v520, %v785
          %787 = vst [vmem:[%s749 + $0x3c] sm:$0xf] %v786
          %788 = vst.msk [vmem:[%s749 + $0x40] sm:$0xf] %vm264, %v529
          %v789 = vld [vmem:[%s749 + $0x44] sm:$0x1]
          %v790 = vsel %vm277, %v530, %v789
          %791 = vst [vmem:[%s749 + $0x44] sm:$0x1] %v790
          %v792 = vld [vmem:[%s749 + $0x48] sm:$0xf]
          %v793 = vsel %vm337, %v537, %v792
          %794 = vst [vmem:[%s749 + $0x48] sm:$0xf] %v793
          %795 = vst.msk [vmem:[%s749 + $0x4c] sm:$0xf] %vm264, %v546
          %v796 = vld [vmem:[%s749 + $0x50] sm:$0x1]
          %v797 = vsel %vm277, %v547, %v796
          %798 = vst [vmem:[%s749 + $0x50] sm:$0x1] %v797
          %v799 = vld [vmem:[%s749 + $0x54] sm:$0xf]
          %v800 = vsel %vm337, %v554, %v799
          %801 = vst [vmem:[%s749 + $0x54] sm:$0xf] %v800
          %802 = vst.msk [vmem:[%s749 + $0x58] sm:$0xf] %vm264, %v563
          %v803 = vld [vmem:[%s749 + $0x5c] sm:$0x1]
          %v804 = vsel %vm277, %v564, %v803
          %805 = vst [vmem:[%s749 + $0x5c] sm:$0x1] %v804
          %v806 = vld [vmem:[%s749 + $0x60] sm:$0xf]
          %v807 = vsel %vm337, %v571, %v806
          %808 = vst [vmem:[%s749 + $0x60] sm:$0xf] %v807
          %809 = vst.msk [vmem:[%s749 + $0x64] sm:$0xf] %vm264, %v580
          %v810 = vld [vmem:[%s749 + $0x68] sm:$0x1]
          %v811 = vsel %vm277, %v581, %v810
          %812 = vst [vmem:[%s749 + $0x68] sm:$0x1] %v811
          %v813 = vld [vmem:[%s749 + $0x6c] sm:$0xf]
          %v814 = vsel %vm337, %v588, %v813
          %815 = vst [vmem:[%s749 + $0x6c] sm:$0xf] %v814
          %816 = vst.msk [vmem:[%s749 + $0x70] sm:$0xf] %vm264, %v597
          %v817 = vld [vmem:[%s749 + $0x74] sm:$0x1]
          %v818 = vsel %vm277, %v598, %v817
          %819 = vst [vmem:[%s749 + $0x74] sm:$0x1] %v818
          %v820 = vld [vmem:[%s749 + $0x78] sm:$0xf]
          %v821 = vsel %vm337, %v605, %v820
          %822 = vst [vmem:[%s749 + $0x78] sm:$0xf] %v821
          %823 = vst.msk [vmem:[%s749 + $0x7c] sm:$0xf] %vm264, %v614
          %v824 = vld [vmem:[%s749 + $0x80] sm:$0x1]
          %v825 = vsel %vm277, %v615, %v824
          %826 = vst [vmem:[%s749 + $0x80] sm:$0x1] %v825
          %v827 = vld [vmem:[%s749 + $0x84] sm:$0xf]
          %v828 = vsel %vm337, %v622, %v827
          %829 = vst [vmem:[%s749 + $0x84] sm:$0xf] %v828
          %830 = vst.msk [vmem:[%s749 + $0x88] sm:$0xf] %vm264, %v631
          %v831 = vld [vmem:[%s749 + $0x8c] sm:$0x1]
          %v832 = vsel %vm277, %v632, %v831
          %833 = vst [vmem:[%s749 + $0x8c] sm:$0x1] %v832
          %v834 = vld [vmem:[%s749 + $0x90] sm:$0xf]
          %v835 = vsel %vm337, %v639, %v834
          %836 = vst [vmem:[%s749 + $0x90] sm:$0xf] %v835
          %837 = vst.msk [vmem:[%s749 + $0x94] sm:$0xf] %vm264, %v648
          %v838 = vld [vmem:[%s749 + $0x98] sm:$0x1]
          %v839 = vsel %vm277, %v649, %v838
          %840 = vst [vmem:[%s749 + $0x98] sm:$0x1] %v839
          %v841 = vld [vmem:[%s749 + $0x9c] sm:$0xf]
          %v842 = vsel %vm337, %v656, %v841
          %843 = vst [vmem:[%s749 + $0x9c] sm:$0xf] %v842
          %844 = vst.msk [vmem:[%s749 + $0xa0] sm:$0xf] %vm264, %v665
          %v845 = vld [vmem:[%s749 + $0xa4] sm:$0x1]
          %v846 = vsel %vm277, %v666, %v845
          %847 = vst [vmem:[%s749 + $0xa4] sm:$0x1] %v846
          %v848 = vld [vmem:[%s749 + $0xa8] sm:$0xf]
          %v849 = vsel %vm337, %v673, %v848
          %850 = vst [vmem:[%s749 + $0xa8] sm:$0xf] %v849
          %851 = vst.msk [vmem:[%s749 + $0xac] sm:$0xf] %vm264, %v682
          %v852 = vld [vmem:[%s749 + $0xb0] sm:$0x1]
          %v853 = vsel %vm277, %v683, %v852
          %854 = vst [vmem:[%s749 + $0xb0] sm:$0x1] %v853
          %v855 = vld [vmem:[%s749 + $0xb4] sm:$0xf]
          %v856 = vsel %vm337, %v690, %v855
          %857 = vst [vmem:[%s749 + $0xb4] sm:$0xf] %v856
          %858 = vst.msk [vmem:[%s749 + $0xb8] sm:$0xf] %vm264, %v699
          %v859 = vld [vmem:[%s749 + $0xbc] sm:$0x1]
          %v860 = vsel %vm277, %v700, %v859
          %861 = vst [vmem:[%s749 + $0xbc] sm:$0x1] %v860
        $region44: #{tpu_custom_call.1} parent=31 // pred_fallthru
          _
        %v862 = vld [vmem:[%s253] sm:$0x3]
        %s863 = smul.u32 %s28, 8
        %s864 = smul.u32 %s863, 3
        %s865 = smul.addr %s864, 4
        %s866 = scalar_lea.vmem [#allocation2], %s865
        %v867 = vld [vmem:[%s866] sm:$0xf]
        %v868 = vld [vmem:[%s866 + $0x4] sm:$0xf]
        %v869 = vld [vmem:[%s866 + $0x8] sm:$0xf]
        %v870 = vld [vmem:[%s866 + $0xc] sm:$0xf]
        %v871 = vld [vmem:[%s866 + $0x10] sm:$0xf]
        %v872 = vld [vmem:[%s866 + $0x14] sm:$0xf]
        %v873 = vld [vmem:[%s866 + $0x18] sm:$0xf]
        %v874 = vld [vmem:[%s866 + $0x1c] sm:$0xf]
        %v875 = vld [vmem:[%s866 + $0x20] sm:$0xf]
        %v876 = vld [vmem:[%s866 + $0x24] sm:$0xf]
        %v877 = vld [vmem:[%s866 + $0x28] sm:$0xf]
        %v878 = vld [vmem:[%s866 + $0x2c] sm:$0xf]
        %v879 = vld [vmem:[%s866 + $0x30] sm:$0xf]
        %v880 = vld [vmem:[%s866 + $0x34] sm:$0xf]
        %v881 = vld [vmem:[%s866 + $0x38] sm:$0xf]
        %v882 = vld [vmem:[%s866 + $0x3c] sm:$0xf]
        %v883 = vld [vmem:[%s866 + $0x40] sm:$0xf]
        %v884 = vld [vmem:[%s866 + $0x44] sm:$0xf]
        %v885 = vld [vmem:[%s866 + $0x48] sm:$0xf]
        %v886 = vld [vmem:[%s866 + $0x4c] sm:$0xf]
        %v887 = vld [vmem:[%s866 + $0x50] sm:$0xf]
        %v888 = vld [vmem:[%s866 + $0x54] sm:$0xf]
        %v889 = vld [vmem:[%s866 + $0x58] sm:$0xf]
        %v890 = vld [vmem:[%s866 + $0x5c] sm:$0xf]
        %v891 = vld [vmem:[%s866 + $0x60] sm:$0xf]
        %v916 = vunpack.c.l.b16 %v867
        %v917 = vunpack.c.l.b16 %v868
        %v918 = vunpack.c.l.b16 %v869
        %v919 = vunpack.c.l.b16 %v870
        %v920 = vunpack.c.l.b16 %v871
        %v921 = vunpack.c.l.b16 %v872
        %v922 = vunpack.c.l.b16 %v873
        %v923 = vunpack.c.l.b16 %v874
        %v924 = vunpack.c.l.b16 %v875
        %v925 = vunpack.c.l.b16 %v876
        %v926 = vunpack.c.l.b16 %v877
        %v927 = vunpack.c.l.b16 %v878
        %v928 = vunpack.c.l.b16 %v879
        %v929 = vunpack.c.l.b16 %v880
        %v930 = vunpack.c.l.b16 %v881
        %v931 = vunpack.c.l.b16 %v882
        %v932 = vunpack.c.l.b16 %v883
        %v933 = vunpack.c.l.b16 %v884
        %v934 = vunpack.c.l.b16 %v885
        %v935 = vunpack.c.l.b16 %v886
        %v936 = vunpack.c.l.b16 %v887
        %v937 = vunpack.c.l.b16 %v888
        %v938 = vunpack.c.l.b16 %v889
        %v939 = vunpack.c.l.b16 %v890
        %v940 = vpack.c.b16 %v917, %v916
        %v941 = vpack.c.b16 %v919, %v918
        %v942 = vpack.c.b16 %v921, %v920
        %v943 = vpack.c.b16 %v923, %v922
        %v944 = vpack.c.b16 %v925, %v924
        %v945 = vpack.c.b16 %v927, %v926
        %v946 = vpack.c.b16 %v929, %v928
        %v947 = vpack.c.b16 %v931, %v930
        %v948 = vpack.c.b16 %v933, %v932
        %v949 = vpack.c.b16 %v935, %v934
        %v950 = vpack.c.b16 %v937, %v936
        %v951 = vpack.c.b16 %v939, %v938
        %v953 = vunpack.c.l.b16 %v891
        %v954 = vpack.c.b16 %v953, %v953
        %vm955 = vsmask.f32 7424
        %v957 = vshrl.u32 %v940, 16
        %v959 = vshll.u32 %v940, 16
        %v961 = vrot.slane %v959, 1
        %v962 = vor.u32 %v957, %v961
        %v964 = vshll.u32 %v941, 16
        %v966 = vrot.slane %v964, 1
        %v967 = vsel %vm955, %v962, %v966
        %v968 = vshrl.u32 %v941, 16
        %v970 = vor.u32 %v968, %v966
        %v972 = vshll.u32 %v942, 16
        %v974 = vrot.slane %v972, 1
        %v975 = vsel %vm955, %v970, %v974
        %v976 = vshrl.u32 %v942, 16
        %v978 = vor.u32 %v976, %v974
        %v980 = vshll.u32 %v943, 16
        %v982 = vrot.slane %v980, 1
        %v983 = vsel %vm955, %v978, %v982
        %v984 = vshrl.u32 %v943, 16
        %v986 = vor.u32 %v984, %v982
        %v988 = vshll.u32 %v944, 16
        %v990 = vrot.slane %v988, 1
        %v991 = vsel %vm955, %v986, %v990
        %v992 = vshrl.u32 %v944, 16
        %v994 = vor.u32 %v992, %v990
        %v996 = vshll.u32 %v945, 16
        %v998 = vrot.slane %v996, 1
        %v999 = vsel %vm955, %v994, %v998
        %v1000 = vshrl.u32 %v945, 16
        %v1002 = vor.u32 %v1000, %v998
        %v1004 = vshll.u32 %v946, 16
        %v1006 = vrot.slane %v1004, 1
        %v1007 = vsel %vm955, %v1002, %v1006
        %v1008 = vshrl.u32 %v946, 16
        %v1010 = vor.u32 %v1008, %v1006
        %v1012 = vshll.u32 %v947, 16
        %v1014 = vrot.slane %v1012, 1
        %v1015 = vsel %vm955, %v1010, %v1014
        %v1016 = vshrl.u32 %v947, 16
        %v1018 = vor.u32 %v1016, %v1014
        %v1020 = vshll.u32 %v948, 16
        %v1022 = vrot.slane %v1020, 1
        %v1023 = vsel %vm955, %v1018, %v1022
        %v1024 = vshrl.u32 %v948, 16
        %v1026 = vor.u32 %v1024, %v1022
        %v1028 = vshll.u32 %v949, 16
        %v1030 = vrot.slane %v1028, 1
        %v1031 = vsel %vm955, %v1026, %v1030
        %v1032 = vshrl.u32 %v949, 16
        %v1034 = vor.u32 %v1032, %v1030
        %v1036 = vshll.u32 %v950, 16
        %v1038 = vrot.slane %v1036, 1
        %v1039 = vsel %vm955, %v1034, %v1038
        %v1040 = vshrl.u32 %v950, 16
        %v1042 = vor.u32 %v1040, %v1038
        %v1044 = vshll.u32 %v951, 16
        %v1046 = vrot.slane %v1044, 1
        %v1047 = vsel %vm955, %v1042, %v1046
        %v1048 = vshrl.u32 %v951, 16
        %v1050 = vor.u32 %v1048, %v1046
        %v1052 = vshll.u32 %v954, 16
        %v1054 = vrot.slane %v1052, 1
        %v1055 = vsel %vm955, %v1050, %v1054
        %1056 = vrot.lane.b32.xlu0 %v967, 16
        %v1057 = vpop.permute.xlu0 %1056
        %1058 = vrot.lane.b32.xlu0 %v975, 16
        %v1059 = vpop.permute.xlu0 %1058
        %1060 = vrot.lane.b32.xlu0 %v983, 16
        %v1061 = vpop.permute.xlu0 %1060
        %1062 = vrot.lane.b32.xlu0 %v991, 16
        %v1063 = vpop.permute.xlu0 %1062
        %1064 = vrot.lane.b32.xlu0 %v999, 16
        %v1065 = vpop.permute.xlu0 %1064
        %1066 = vrot.lane.b32.xlu0 %v1007, 16
        %v1067 = vpop.permute.xlu0 %1066
        %1068 = vrot.lane.b32.xlu0 %v1015, 16
        %v1069 = vpop.permute.xlu0 %1068
        %1070 = vrot.lane.b32.xlu0 %v1023, 16
        %v1071 = vpop.permute.xlu0 %1070
        %1072 = vrot.lane.b32.xlu0 %v1031, 16
        %v1073 = vpop.permute.xlu0 %1072
        %1074 = vrot.lane.b32.xlu0 %v1039, 16
        %v1075 = vpop.permute.xlu0 %1074
        %1076 = vrot.lane.b32.xlu0 %v1047, 16
        %v1077 = vpop.permute.xlu0 %1076
        %1078 = vrot.lane.b32.xlu0 %v1055, 16
        %v1079 = vpop.permute.xlu0 %1078
        %vm1080 = vcmask 1046528
        %v1081 = vrot.slane %v940, 1
        %v1082 = vrot.slane %v941, 1
        %v1083 = vsel %vm1080, %v1081, %v1082
        %v1084 = vrot.slane %v942, 1
        %v1085 = vsel %vm1080, %v1082, %v1084
        %v1086 = vrot.slane %v943, 1
        %v1087 = vsel %vm1080, %v1084, %v1086
        %v1088 = vrot.slane %v944, 1
        %v1089 = vsel %vm1080, %v1086, %v1088
        %v1090 = vrot.slane %v945, 1
        %v1091 = vsel %vm1080, %v1088, %v1090
        %v1092 = vrot.slane %v946, 1
        %v1093 = vsel %vm1080, %v1090, %v1092
        %v1094 = vrot.slane %v947, 1
        %v1095 = vsel %vm1080, %v1092, %v1094
        %v1096 = vrot.slane %v948, 1
        %v1097 = vsel %vm1080, %v1094, %v1096
        %v1098 = vrot.slane %v949, 1
        %v1099 = vsel %vm1080, %v1096, %v1098
        %v1100 = vrot.slane %v950, 1
        %v1101 = vsel %vm1080, %v1098, %v1100
        %v1102 = vrot.slane %v951, 1
        %v1103 = vsel %vm1080, %v1100, %v1102
        %v1104 = vrot.slane %v954, 1
        %v1105 = vsel %vm1080, %v1102, %v1104
        %1106 = vrot.lane.b32.xlu0 %v1083, 32
        %v1107 = vpop.permute.xlu0 %1106
        %1108 = vrot.lane.b32.xlu0 %v1085, 32
        %v1109 = vpop.permute.xlu0 %1108
        %1110 = vrot.lane.b32.xlu0 %v1087, 32
        %v1111 = vpop.permute.xlu0 %1110
        %1112 = vrot.lane.b32.xlu0 %v1089, 32
        %v1113 = vpop.permute.xlu0 %1112
        %1114 = vrot.lane.b32.xlu0 %v1091, 32
        %v1115 = vpop.permute.xlu0 %1114
        %1116 = vrot.lane.b32.xlu0 %v1093, 32
        %v1117 = vpop.permute.xlu0 %1116
        %1118 = vrot.lane.b32.xlu0 %v1095, 32
        %v1119 = vpop.permute.xlu0 %1118
        %1120 = vrot.lane.b32.xlu0 %v1097, 32
        %v1121 = vpop.permute.xlu0 %1120
        %1122 = vrot.lane.b32.xlu0 %v1099, 32
        %v1123 = vpop.permute.xlu0 %1122
        %1124 = vrot.lane.b32.xlu0 %v1101, 32
        %v1125 = vpop.permute.xlu0 %1124
        %1126 = vrot.lane.b32.xlu0 %v1103, 32
        %v1127 = vpop.permute.xlu0 %1126
        %1128 = vrot.lane.b32.xlu0 %v1105, 32
        %v1129 = vpop.permute.xlu0 %1128
        %vm1130 = vcmask 130048
        %v1132 = vsel %vm1130, %v940, %v1057
        %v1134 = vsel %vm1130, %v941, %v1059
        %v1136 = vsel %vm1130, %v942, %v1061
        %v1138 = vsel %vm1130, %v943, %v1063
        %v1140 = vsel %vm1130, %v944, %v1065
        %v1142 = vsel %vm1130, %v945, %v1067
        %v1144 = vsel %vm1130, %v946, %v1069
        %v1146 = vsel %vm1130, %v947, %v1071
        %v1148 = vsel %vm1130, %v948, %v1073
        %v1150 = vsel %vm1130, %v949, %v1075
        %v1152 = vsel %vm1130, %v950, %v1077
        %v1154 = vsel %vm1130, %v951, %v1079
        %vm1155 = vcmask 261120
        %v1157 = vsel %vm1155, %v1132, %v1107
        %v1159 = vsel %vm1155, %v1134, %v1109
        %v1161 = vsel %vm1155, %v1136, %v1111
        %v1163 = vsel %vm1155, %v1138, %v1113
        %v1165 = vsel %vm1155, %v1140, %v1115
        %v1167 = vsel %vm1155, %v1142, %v1117
        %v1169 = vsel %vm1155, %v1144, %v1119
        %v1171 = vsel %vm1155, %v1146, %v1121
        %v1173 = vsel %vm1155, %v1148, %v1123
        %v1175 = vsel %vm1155, %v1150, %v1125
        %v1177 = vsel %vm1155, %v1152, %v1127
        %v1179 = vsel %vm1155, %v1154, %v1129
        %v1180 = vld [vmem:[#allocation6] sm:$0xff]
        %v1181 = vld [vmem:[#allocation6 + $0x8] sm:$0xff]
        %v1182 = vld [vmem:[#allocation6 + $0x10] sm:$0xff]
        %v1183 = vld [vmem:[#allocation6 + $0x18] sm:$0xff]
        %v1184 = vld [vmem:[#allocation6 + $0x20] sm:$0xff]
        %v1185 = vld [vmem:[#allocation6 + $0x28] sm:$0xff]
        %s1186 = sadd.s32 %s863, 1
        %s1187 = smul.u32 %s1186, 3
        %s1188 = smul.addr %s1187, 4
        %s1189 = scalar_lea.vmem [#allocation2], %s1188
        %v1190 = vld [vmem:[%s1189] sm:$0xf]
        %v1191 = vld [vmem:[%s1189 + $0x4] sm:$0xf]
        %v1192 = vld [vmem:[%s1189 + $0x8] sm:$0xf]
        %v1193 = vld [vmem:[%s1189 + $0xc] sm:$0xf]
        %v1194 = vld [vmem:[%s1189 + $0x10] sm:$0xf]
        %v1195 = vld [vmem:[%s1189 + $0x14] sm:$0xf]
        %v1196 = vld [vmem:[%s1189 + $0x18] sm:$0xf]
        %v1197 = vld [vmem:[%s1189 + $0x1c] sm:$0xf]
        %v1198 = vld [vmem:[%s1189 + $0x20] sm:$0xf]
        %v1199 = vld [vmem:[%s1189 + $0x24] sm:$0xf]
        %v1200 = vld [vmem:[%s1189 + $0x28] sm:$0xf]
        %v1201 = vld [vmem:[%s1189 + $0x2c] sm:$0xf]
        %v1202 = vld [vmem:[%s1189 + $0x30] sm:$0xf]
        %v1203 = vld [vmem:[%s1189 + $0x34] sm:$0xf]
        %v1204 = vld [vmem:[%s1189 + $0x38] sm:$0xf]
        %v1205 = vld [vmem:[%s1189 + $0x3c] sm:$0xf]
        %v1206 = vld [vmem:[%s1189 + $0x40] sm:$0xf]
        %v1207 = vld [vmem:[%s1189 + $0x44] sm:$0xf]
        %v1208 = vld [vmem:[%s1189 + $0x48] sm:$0xf]
        %v1209 = vld [vmem:[%s1189 + $0x4c] sm:$0xf]
        %v1210 = vld [vmem:[%s1189 + $0x50] sm:$0xf]
        %v1211 = vld [vmem:[%s1189 + $0x54] sm:$0xf]
        %v1212 = vld [vmem:[%s1189 + $0x58] sm:$0xf]
        %v1213 = vld [vmem:[%s1189 + $0x5c] sm:$0xf]
        %v1214 = vld [vmem:[%s1189 + $0x60] sm:$0xf]
        %v1239 = vunpack.c.l.b16 %v1190
        %v1240 = vunpack.c.l.b16 %v1191
        %v1241 = vunpack.c.l.b16 %v1192
        %v1242 = vunpack.c.l.b16 %v1193
        %v1243 = vunpack.c.l.b16 %v1194
        %v1244 = vunpack.c.l.b16 %v1195
        %v1245 = vunpack.c.l.b16 %v1196
        %v1246 = vunpack.c.l.b16 %v1197
        %v1247 = vunpack.c.l.b16 %v1198
        %v1248 = vunpack.c.l.b16 %v1199
        %v1249 = vunpack.c.l.b16 %v1200
        %v1250 = vunpack.c.l.b16 %v1201
        %v1251 = vunpack.c.l.b16 %v1202
        %v1252 = vunpack.c.l.b16 %v1203
        %v1253 = vunpack.c.l.b16 %v1204
        %v1254 = vunpack.c.l.b16 %v1205
        %v1255 = vunpack.c.l.b16 %v1206
        %v1256 = vunpack.c.l.b16 %v1207
        %v1257 = vunpack.c.l.b16 %v1208
        %v1258 = vunpack.c.l.b16 %v1209
        %v1259 = vunpack.c.l.b16 %v1210
        %v1260 = vunpack.c.l.b16 %v1211
        %v1261 = vunpack.c.l.b16 %v1212
        %v1262 = vunpack.c.l.b16 %v1213
        %v1263 = vpack.c.b16 %v1240, %v1239
        %v1264 = vpack.c.b16 %v1242, %v1241
        %v1265 = vpack.c.b16 %v1244, %v1243
        %v1266 = vpack.c.b16 %v1246, %v1245
        %v1267 = vpack.c.b16 %v1248, %v1247
        %v1268 = vpack.c.b16 %v1250, %v1249
        %v1269 = vpack.c.b16 %v1252, %v1251
        %v1270 = vpack.c.b16 %v1254, %v1253
        %v1271 = vpack.c.b16 %v1256, %v1255
        %v1272 = vpack.c.b16 %v1258, %v1257
        %v1273 = vpack.c.b16 %v1260, %v1259
        %v1274 = vpack.c.b16 %v1262, %v1261
        %v1276 = vunpack.c.l.b16 %v1214
        %v1277 = vpack.c.b16 %v1276, %v1276
        %v1279 = vshrl.u32 %v1263, 16
        %v1281 = vshll.u32 %v1263, 16
        %v1283 = vrot.slane %v1281, 1
        %v1284 = vor.u32 %v1279, %v1283
        %v1286 = vshll.u32 %v1264, 16
        %v1288 = vrot.slane %v1286, 1
        %v1289 = vsel %vm955, %v1284, %v1288
        %v1290 = vshrl.u32 %v1264, 16
        %v1292 = vor.u32 %v1290, %v1288
        %v1294 = vshll.u32 %v1265, 16
        %v1296 = vrot.slane %v1294, 1
        %v1297 = vsel %vm955, %v1292, %v1296
        %v1298 = vshrl.u32 %v1265, 16
        %v1300 = vor.u32 %v1298, %v1296
        %v1302 = vshll.u32 %v1266, 16
        %v1304 = vrot.slane %v1302, 1
        %v1305 = vsel %vm955, %v1300, %v1304
        %v1306 = vshrl.u32 %v1266, 16
        %v1308 = vor.u32 %v1306, %v1304
        %v1310 = vshll.u32 %v1267, 16
        %v1312 = vrot.slane %v1310, 1
        %v1313 = vsel %vm955, %v1308, %v1312
        %v1314 = vshrl.u32 %v1267, 16
        %v1316 = vor.u32 %v1314, %v1312
        %v1318 = vshll.u32 %v1268, 16
        %v1320 = vrot.slane %v1318, 1
        %v1321 = vsel %vm955, %v1316, %v1320
        %v1322 = vshrl.u32 %v1268, 16
        %v1324 = vor.u32 %v1322, %v1320
        %v1326 = vshll.u32 %v1269, 16
        %v1328 = vrot.slane %v1326, 1
        %v1329 = vsel %vm955, %v1324, %v1328
        %v1330 = vshrl.u32 %v1269, 16
        %v1332 = vor.u32 %v1330, %v1328
        %v1334 = vshll.u32 %v1270, 16
        %v1336 = vrot.slane %v1334, 1
        %v1337 = vsel %vm955, %v1332, %v1336
        %v1338 = vshrl.u32 %v1270, 16
        %v1340 = vor.u32 %v1338, %v1336
        %v1342 = vshll.u32 %v1271, 16
        %v1344 = vrot.slane %v1342, 1
        %v1345 = vsel %vm955, %v1340, %v1344
        %v1346 = vshrl.u32 %v1271, 16
        %v1348 = vor.u32 %v1346, %v1344
        %v1350 = vshll.u32 %v1272, 16
        %v1352 = vrot.slane %v1350, 1
        %v1353 = vsel %vm955, %v1348, %v1352
        %v1354 = vshrl.u32 %v1272, 16
        %v1356 = vor.u32 %v1354, %v1352
        %v1358 = vshll.u32 %v1273, 16
        %v1360 = vrot.slane %v1358, 1
        %v1361 = vsel %vm955, %v1356, %v1360
        %v1362 = vshrl.u32 %v1273, 16
        %v1364 = vor.u32 %v1362, %v1360
        %v1366 = vshll.u32 %v1274, 16
        %v1368 = vrot.slane %v1366, 1
        %v1369 = vsel %vm955, %v1364, %v1368
        %v1370 = vshrl.u32 %v1274, 16
        %v1372 = vor.u32 %v1370, %v1368
        %v1374 = vshll.u32 %v1277, 16
        %v1376 = vrot.slane %v1374, 1
        %v1377 = vsel %vm955, %v1372, %v1376
        %1378 = vrot.lane.b32.xlu0 %v1289, 16
        %v1379 = vpop.permute.xlu0 %1378
        %1380 = vrot.lane.b32.xlu0 %v1297, 16
        %v1381 = vpop.permute.xlu0 %1380
        %1382 = vrot.lane.b32.xlu0 %v1305, 16
        %v1383 = vpop.permute.xlu0 %1382
        %1384 = vrot.lane.b32.xlu0 %v1313, 16
        %v1385 = vpop.permute.xlu0 %1384
        %1386 = vrot.lane.b32.xlu0 %v1321, 16
        %v1387 = vpop.permute.xlu0 %1386
        %1388 = vrot.lane.b32.xlu0 %v1329, 16
        %v1389 = vpop.permute.xlu0 %1388
        %1390 = vrot.lane.b32.xlu0 %v1337, 16
        %v1391 = vpop.permute.xlu0 %1390
        %1392 = vrot.lane.b32.xlu0 %v1345, 16
        %v1393 = vpop.permute.xlu0 %1392
        %1394 = vrot.lane.b32.xlu0 %v1353, 16
        %v1395 = vpop.permute.xlu0 %1394
        %1396 = vrot.lane.b32.xlu0 %v1361, 16
        %v1397 = vpop.permute.xlu0 %1396
        %1398 = vrot.lane.b32.xlu0 %v1369, 16
        %v1399 = vpop.permute.xlu0 %1398
        %1400 = vrot.lane.b32.xlu0 %v1377, 16
        %v1401 = vpop.permute.xlu0 %1400
        %v1402 = vrot.slane %v1263, 1
        %v1403 = vrot.slane %v1264, 1
        %v1404 = vsel %vm1080, %v1402, %v1403
        %v1405 = vrot.slane %v1265, 1
        %v1406 = vsel %vm1080, %v1403, %v1405
        %v1407 = vrot.slane %v1266, 1
        %v1408 = vsel %vm1080, %v1405, %v1407
        %v1409 = vrot.slane %v1267, 1
        %v1410 = vsel %vm1080, %v1407, %v1409
        %v1411 = vrot.slane %v1268, 1
        %v1412 = vsel %vm1080, %v1409, %v1411
        %v1413 = vrot.slane %v1269, 1
        %v1414 = vsel %vm1080, %v1411, %v1413
        %v1415 = vrot.slane %v1270, 1
        %v1416 = vsel %vm1080, %v1413, %v1415
        %v1417 = vrot.slane %v1271, 1
        %v1418 = vsel %vm1080, %v1415, %v1417
        %v1419 = vrot.slane %v1272, 1
        %v1420 = vsel %vm1080, %v1417, %v1419
        %v1421 = vrot.slane %v1273, 1
        %v1422 = vsel %vm1080, %v1419, %v1421
        %v1423 = vrot.slane %v1274, 1
        %v1424 = vsel %vm1080, %v1421, %v1423
        %v1425 = vrot.slane %v1277, 1
        %v1426 = vsel %vm1080, %v1423, %v1425
        %1427 = vrot.lane.b32.xlu0 %v1404, 32
        %v1428 = vpop.permute.xlu0 %1427
        %1429 = vrot.lane.b32.xlu0 %v1406, 32
        %v1430 = vpop.permute.xlu0 %1429
        %1431 = vrot.lane.b32.xlu0 %v1408, 32
        %v1432 = vpop.permute.xlu0 %1431
        %1433 = vrot.lane.b32.xlu0 %v1410, 32
        %v1434 = vpop.permute.xlu0 %1433
        %1435 = vrot.lane.b32.xlu0 %v1412, 32
        %v1436 = vpop.permute.xlu0 %1435
        %1437 = vrot.lane.b32.xlu0 %v1414, 32
        %v1438 = vpop.permute.xlu0 %1437
        %1439 = vrot.lane.b32.xlu0 %v1416, 32
        %v1440 = vpop.permute.xlu0 %1439
        %1441 = vrot.lane.b32.xlu0 %v1418, 32
        %v1442 = vpop.permute.xlu0 %1441
        %1443 = vrot.lane.b32.xlu0 %v1420, 32
        %v1444 = vpop.permute.xlu0 %1443
        %1445 = vrot.lane.b32.xlu0 %v1422, 32
        %v1446 = vpop.permute.xlu0 %1445
        %1447 = vrot.lane.b32.xlu0 %v1424, 32
        %v1448 = vpop.permute.xlu0 %1447
        %1449 = vrot.lane.b32.xlu0 %v1426, 32
        %v1450 = vpop.permute.xlu0 %1449
        %v1452 = vsel %vm1130, %v1263, %v1379
        %v1454 = vsel %vm1130, %v1264, %v1381
        %v1456 = vsel %vm1130, %v1265, %v1383
        %v1458 = vsel %vm1130, %v1266, %v1385
        %v1460 = vsel %vm1130, %v1267, %v1387
        %v1462 = vsel %vm1130, %v1268, %v1389
        %v1464 = vsel %vm1130, %v1269, %v1391
        %v1466 = vsel %vm1130, %v1270, %v1393
        %v1468 = vsel %vm1130, %v1271, %v1395
        %v1470 = vsel %vm1130, %v1272, %v1397
        %v1472 = vsel %vm1130, %v1273, %v1399
        %v1474 = vsel %vm1130, %v1274, %v1401
        %v1476 = vsel %vm1155, %v1452, %v1428
        %v1478 = vsel %vm1155, %v1454, %v1430
        %v1480 = vsel %vm1155, %v1456, %v1432
        %v1482 = vsel %vm1155, %v1458, %v1434
        %v1484 = vsel %vm1155, %v1460, %v1436
        %v1486 = vsel %vm1155, %v1462, %v1438
        %v1488 = vsel %vm1155, %v1464, %v1440
        %v1490 = vsel %vm1155, %v1466, %v1442
        %v1492 = vsel %vm1155, %v1468, %v1444
        %v1494 = vsel %vm1155, %v1470, %v1446
        %v1496 = vsel %vm1155, %v1472, %v1448
        %v1498 = vsel %vm1155, %v1474, %v1450
        %s1499 = scalar_lea.vmem [#allocation6], 48
        %v1500 = vld [vmem:[%s1499] sm:$0xff]
        %v1501 = vld [vmem:[%s1499 + $0x8] sm:$0xff]
        %v1502 = vld [vmem:[%s1499 + $0x10] sm:$0xff]
        %v1503 = vld [vmem:[%s1499 + $0x18] sm:$0xff]
        %v1504 = vld [vmem:[%s1499 + $0x20] sm:$0xff]
        %v1505 = vld [vmem:[%s1499 + $0x28] sm:$0xff]
        %v1512 = vunpack.c.l.b16 %v1500
        %v1513 = vunpack.c.h.b16 %v1500
        %v1514 = vunpack.c.l.b16 %v1501
        %v1515 = vunpack.c.h.b16 %v1501
        %v1516 = vunpack.c.l.b16 %v1502
        %v1517 = vunpack.c.h.b16 %v1502
        %v1518 = vunpack.c.l.b16 %v1503
        %v1519 = vunpack.c.h.b16 %v1503
        %v1520 = vunpack.c.l.b16 %v1504
        %v1521 = vunpack.c.h.b16 %v1504
        %v1522 = vunpack.c.l.b16 %v1505
        %v1523 = vunpack.c.h.b16 %v1505
        %v1524 = vpack.c.b16 %v1514, %v1512
        %v1525 = vpack.c.b16 %v1515, %v1513
        %v1526 = vpack.c.b16 %v1518, %v1516
        %v1527 = vpack.c.b16 %v1519, %v1517
        %v1528 = vpack.c.b16 %v1522, %v1520
        %v1529 = vpack.c.b16 %v1523, %v1521
        %vm1536 = vcmask 392192
        %v1537 = vsel %vm1536, %v1476, 0
        %v1539 = vsel %vm1536, %v1478, 0
        %v1541 = vsel %vm1536, %v1480, 0
        %v1543 = vsel %vm1536, %v1482, 0
        %v1545 = vsel %vm1536, %v1484, 0
        %v1547 = vsel %vm1536, %v1486, 0
        %v1549 = vsel %vm1536, %v1488, 0
        %v1551 = vsel %vm1536, %v1490, 0
        %v1553 = vsel %vm1536, %v1492, 0
        %v1555 = vsel %vm1536, %v1494, 0
        %v1557 = vsel %vm1536, %v1496, 0
        %v1559 = vsel %vm1536, %v1498, 0
        %1561 = vmatprep.subr.bf16.mxu0 %v1525
        %1562 = vmatpush1.bf16.msra.mxu0 %v1524
        %1563 = vmatprep.subr.bf16.mxu0 %v1527
        %1564 = vmatpush1.bf16.msra.mxu0 %v1526
        %1565 = vmatprep.subr.bf16.mxu0 %v1529
        %1566 = vmatpush1.bf16.msra.mxu0 %v1528
        %1567 = vmatprep.subr.bf16.mxu0 0
        %1568 = vmatpush1.bf16.msra.mxu0 0
        %1569 = vmatprep.subr.bf16.mxu0 0
        %1570 = vmatpush1.bf16.msra.mxu0 0
        %1571 = vmatprep.subr.bf16.mxu0 0
        %1572 = vmatpush1.bf16.msra.mxu0 0
        %1573 = vmatprep.subr.bf16.mxu0 0
        %1574 = vmatpush1.bf16.msra.mxu0 0
        %1575 = vmatprep.subr.bf16.mxu0 0
        %1576 = vmatpush1.bf16.msra.mxu0 0
        %1577 = vmatprep.subr.bf16.mxu0 0
        %1578 = vmatpush1.bf16.msra.mxu0 0
        %1579 = vmatprep.subr.bf16.mxu0 0
        %1580 = vmatpush1.bf16.msra.mxu0 0
        %1581 = vmatprep.subr.bf16.mxu0 0
        %1582 = vmatpush1.bf16.msra.mxu0 0
        %1583 = vmatprep.subr.bf16.mxu0 0
        %1584 = vmatpush1.bf16.msra.mxu0 0
        %1585 = vmatprep.subr.bf16.mxu0 0
        %1586 = vmatpush1.bf16.msra.mxu0 0
        %1587 = vmatprep.subr.bf16.mxu0 0
        %1588 = vmatpush1.bf16.msra.mxu0 0
        %1589 = vmatprep.subr.bf16.mxu0 0
        %1590 = vmatpush1.bf16.msra.mxu0 0
        %1591 = vmatprep.subr.bf16.mxu0 0
        %1592 = vmatpush1.bf16.msra.mxu0 0
        %1593 = vmatprep.mubr.bf16.mxu0 0
        %1594 = vmatmul.mubr.bf16.gmra.mrb[0].mxu0 %v1537
        %v1595 = vpop.f32.mrb[0].mxu0
        %v1596 = vadd.f32 0.0, %v1595
        %v1597 = vpop.f32.mrb[0].mxu0
        %v1598 = vadd.f32 0.0, %v1597
        %v1599 = vpop.f32.mrb[0].mxu0
        %v1600 = vadd.f32 0.0, %v1599
        %v1601 = vpop.f32.mrb[0].mxu0
        %v1602 = vadd.f32 0.0, %v1601
        %1603 = vmatprep.mubr.bf16.mxu0 0
        %1604 = vmatmul.mubr.bf16.gmra.mrb[0].mxu0 %v1539
        %v1605 = vpop.f32.mrb[0].mxu0
        %v1606 = vadd.f32 0.0, %v1605
        %v1607 = vpop.f32.mrb[0].mxu0
        %v1608 = vadd.f32 0.0, %v1607
        %v1609 = vpop.f32.mrb[0].mxu0
        %v1610 = vadd.f32 0.0, %v1609
        %v1611 = vpop.f32.mrb[0].mxu0
        %v1612 = vadd.f32 0.0, %v1611
        %1613 = vmatprep.mubr.bf16.mxu0 0
        %1614 = vmatmul.mubr.bf16.gmra.mrb[0].mxu0 %v1541
        %v1615 = vpop.f32.mrb[0].mxu0
        %v1616 = vadd.f32 0.0, %v1615
        %v1617 = vpop.f32.mrb[0].mxu0
        %v1618 = vadd.f32 0.0, %v1617
        %v1619 = vpop.f32.mrb[0].mxu0
        %v1620 = vadd.f32 0.0, %v1619
        %v1621 = vpop.f32.mrb[0].mxu0
        %v1622 = vadd.f32 0.0, %v1621
        %1623 = vmatprep.mubr.bf16.mxu0 0
        %1624 = vmatmul.mubr.bf16.gmra.mrb[0].mxu0 %v1543
        %v1625 = vpop.f32.mrb[0].mxu0
        %v1626 = vadd.f32 0.0, %v1625
        %v1627 = vpop.f32.mrb[0].mxu0
        %v1628 = vadd.f32 0.0, %v1627
        %v1629 = vpop.f32.mrb[0].mxu0
        %v1630 = vadd.f32 0.0, %v1629
        %v1631 = vpop.f32.mrb[0].mxu0
        %v1632 = vadd.f32 0.0, %v1631
        %1633 = vmatprep.mubr.bf16.mxu0 0
        %1634 = vmatmul.mubr.bf16.gmra.mrb[0].mxu0 %v1545
        %v1635 = vpop.f32.mrb[0].mxu0
        %v1636 = vadd.f32 0.0, %v1635
        %v1637 = vpop.f32.mrb[0].mxu0
        %v1638 = vadd.f32 0.0, %v1637
        %v1639 = vpop.f32.mrb[0].mxu0
        %v1640 = vadd.f32 0.0, %v1639
        %v1641 = vpop.f32.mrb[0].mxu0
        %v1642 = vadd.f32 0.0, %v1641
        %1643 = vmatprep.mubr.bf16.mxu0 0
        %1644 = vmatmul.mubr.bf16.gmra.mrb[0].mxu0 %v1547
        %v1645 = vpop.f32.mrb[0].mxu0
        %v1646 = vadd.f32 0.0, %v1645
        %v1647 = vpop.f32.mrb[0].mxu0
        %v1648 = vadd.f32 0.0, %v1647
        %v1649 = vpop.f32.mrb[0].mxu0
        %v1650 = vadd.f32 0.0, %v1649
        %v1651 = vpop.f32.mrb[0].mxu0
        %v1652 = vadd.f32 0.0, %v1651
        %1653 = vmatprep.mubr.bf16.mxu0 0
        %1654 = vmatmul.mubr.bf16.gmra.mrb[0].mxu0 %v1549
        %v1655 = vpop.f32.mrb[0].mxu0
        %v1656 = vadd.f32 0.0, %v1655
        %v1657 = vpop.f32.mrb[0].mxu0
        %v1658 = vadd.f32 0.0, %v1657
        %v1659 = vpop.f32.mrb[0].mxu0
        %v1660 = vadd.f32 0.0, %v1659
        %v1661 = vpop.f32.mrb[0].mxu0
        %v1662 = vadd.f32 0.0, %v1661
        %1663 = vmatprep.mubr.bf16.mxu0 0
        %1664 = vmatmul.mubr.bf16.gmra.mrb[0].mxu0 %v1551
        %v1665 = vpop.f32.mrb[0].mxu0
        %v1666 = vadd.f32 0.0, %v1665
        %v1667 = vpop.f32.mrb[0].mxu0
        %v1668 = vadd.f32 0.0, %v1667
        %v1669 = vpop.f32.mrb[0].mxu0
        %v1670 = vadd.f32 0.0, %v1669
        %v1671 = vpop.f32.mrb[0].mxu0
        %v1672 = vadd.f32 0.0, %v1671
        %1673 = vmatprep.mubr.bf16.mxu0 0
        %1674 = vmatmul.mubr.bf16.gmra.mrb[0].mxu0 %v1553
        %v1675 = vpop.f32.mrb[0].mxu0
        %v1676 = vadd.f32 0.0, %v1675
        %v1677 = vpop.f32.mrb[0].mxu0
        %v1678 = vadd.f32 0.0, %v1677
        %v1679 = vpop.f32.mrb[0].mxu0
        %v1680 = vadd.f32 0.0, %v1679
        %v1681 = vpop.f32.mrb[0].mxu0
        %v1682 = vadd.f32 0.0, %v1681
        %1683 = vmatprep.mubr.bf16.mxu0 0
        %1684 = vmatmul.mubr.bf16.gmra.mrb[0].mxu0 %v1555
        %v1685 = vpop.f32.mrb[0].mxu0
        %v1686 = vadd.f32 0.0, %v1685
        %v1687 = vpop.f32.mrb[0].mxu0
        %v1688 = vadd.f32 0.0, %v1687
        %v1689 = vpop.f32.mrb[0].mxu0
        %v1690 = vadd.f32 0.0, %v1689
        %v1691 = vpop.f32.mrb[0].mxu0
        %v1692 = vadd.f32 0.0, %v1691
        %1693 = vmatprep.mubr.bf16.mxu0 0
        %1694 = vmatmul.mubr.bf16.gmra.mrb[0].mxu0 %v1557
        %v1695 = vpop.f32.mrb[0].mxu0
        %v1696 = vadd.f32 0.0, %v1695
        %v1697 = vpop.f32.mrb[0].mxu0
        %v1698 = vadd.f32 0.0, %v1697
        %v1699 = vpop.f32.mrb[0].mxu0
        %v1700 = vadd.f32 0.0, %v1699
        %v1701 = vpop.f32.mrb[0].mxu0
        %v1702 = vadd.f32 0.0, %v1701
        %1703 = vmatprep.mubr.bf16.mxu0 0
        %1704 = vmatmul.mubr.bf16.gmra.mrb[0].mxu0 %v1559
        %v1705 = vpop.f32.mrb[0].mxu0
        %v1706 = vadd.f32 0.0, %v1705
        %v1707 = vpop.f32.mrb[0].mxu0
        %v1708 = vadd.f32 0.0, %v1707
        %v1709 = vpop.f32.mrb[0].mxu0
        %v1710 = vadd.f32 0.0, %v1709
        %v1711 = vpop.f32.mrb[0].mxu0
        %v1712 = vadd.f32 0.0, %v1711
        %1713 = vdwg.mxu0
        %v1720 = vunpack.c.l.b16 %v1180
        %v1721 = vunpack.c.h.b16 %v1180
        %v1722 = vunpack.c.l.b16 %v1181
        %v1723 = vunpack.c.h.b16 %v1181
        %v1724 = vunpack.c.l.b16 %v1182
        %v1725 = vunpack.c.h.b16 %v1182
        %v1726 = vunpack.c.l.b16 %v1183
        %v1727 = vunpack.c.h.b16 %v1183
        %v1728 = vunpack.c.l.b16 %v1184
        %v1729 = vunpack.c.h.b16 %v1184
        %v1730 = vunpack.c.l.b16 %v1185
        %v1731 = vunpack.c.h.b16 %v1185
        %v1732 = vpack.c.b16 %v1722, %v1720
        %v1733 = vpack.c.b16 %v1723, %v1721
        %v1734 = vpack.c.b16 %v1726, %v1724
        %v1735 = vpack.c.b16 %v1727, %v1725
        %v1736 = vpack.c.b16 %v1730, %v1728
        %v1737 = vpack.c.b16 %v1731, %v1729
        %v1744 = vsel %vm1536, %v1157, 0
        %v1746 = vsel %vm1536, %v1159, 0
        %v1748 = vsel %vm1536, %v1161, 0
        %v1750 = vsel %vm1536, %v1163, 0
        %v1752 = vsel %vm1536, %v1165, 0
        %v1754 = vsel %vm1536, %v1167, 0
        %v1756 = vsel %vm1536, %v1169, 0
        %v1758 = vsel %vm1536, %v1171, 0
        %v1760 = vsel %vm1536, %v1173, 0
        %v1762 = vsel %vm1536, %v1175, 0
        %v1764 = vsel %vm1536, %v1177, 0
        %v1766 = vsel %vm1536, %v1179, 0
        %1768 = vmatprep.subr.bf16.mxu0 %v1733
        %1769 = vmatpush1.bf16.msra.mxu0 %v1732
        %1770 = vmatprep.subr.bf16.mxu0 %v1735
        %1771 = vmatpush1.bf16.msra.mxu0 %v1734
        %1772 = vmatprep.subr.bf16.mxu0 %v1737
        %1773 = vmatpush1.bf16.msra.mxu0 %v1736
        %1774 = vmatprep.subr.bf16.mxu0 0
        %1775 = vmatpush1.bf16.msra.mxu0 0
        %1776 = vmatprep.subr.bf16.mxu0 0
        %1777 = vmatpush1.bf16.msra.mxu0 0
        %1778 = vmatprep.subr.bf16.mxu0 0
        %1779 = vmatpush1.bf16.msra.mxu0 0
        %1780 = vmatprep.subr.bf16.mxu0 0
        %1781 = vmatpush1.bf16.msra.mxu0 0
        %1782 = vmatprep.subr.bf16.mxu0 0
        %1783 = vmatpush1.bf16.msra.mxu0 0
        %1784 = vmatprep.subr.bf16.mxu0 0
        %1785 = vmatpush1.bf16.msra.mxu0 0
        %1786 = vmatprep.subr.bf16.mxu0 0
        %1787 = vmatpush1.bf16.msra.mxu0 0
        %1788 = vmatprep.subr.bf16.mxu0 0
        %1789 = vmatpush1.bf16.msra.mxu0 0
        %1790 = vmatprep.subr.bf16.mxu0 0
        %1791 = vmatpush1.bf16.msra.mxu0 0
        %1792 = vmatprep.subr.bf16.mxu0 0
        %1793 = vmatpush1.bf16.msra.mxu0 0
        %1794 = vmatprep.subr.bf16.mxu0 0
        %1795 = vmatpush1.bf16.msra.mxu0 0
        %1796 = vmatprep.subr.bf16.mxu0 0
        %1797 = vmatpush1.bf16.msra.mxu0 0
        %1798 = vmatprep.subr.bf16.mxu0 0
        %1799 = vmatpush1.bf16.msra.mxu0 0
        %1800 = vmatprep.mubr.bf16.mxu0 0
        %1801 = vmatmul.mubr.bf16.gmra.mrb[0].mxu0 %v1744
        %v1802 = vpop.f32.mrb[0].mxu0
        %v1803 = vadd.f32 %v1596, %v1802
        %v1804 = vpop.f32.mrb[0].mxu0
        %v1805 = vadd.f32 %v1598, %v1804
        %v1806 = vpop.f32.mrb[0].mxu0
        %v1807 = vadd.f32 %v1600, %v1806
        %v1808 = vpop.f32.mrb[0].mxu0
        %v1809 = vadd.f32 %v1602, %v1808
        %1810 = vmatprep.mubr.bf16.mxu0 0
        %1811 = vmatmul.mubr.bf16.gmra.mrb[0].mxu0 %v1746
        %v1812 = vpop.f32.mrb[0].mxu0
        %v1813 = vadd.f32 %v1606, %v1812
        %v1814 = vpop.f32.mrb[0].mxu0
        %v1815 = vadd.f32 %v1608, %v1814
        %v1816 = vpop.f32.mrb[0].mxu0
        %v1817 = vadd.f32 %v1610, %v1816
        %v1818 = vpop.f32.mrb[0].mxu0
        %v1819 = vadd.f32 %v1612, %v1818
        %1820 = vmatprep.mubr.bf16.mxu0 0
        %1821 = vmatmul.mubr.bf16.gmra.mrb[0].mxu0 %v1748
        %v1822 = vpop.f32.mrb[0].mxu0
        %v1823 = vadd.f32 %v1616, %v1822
        %v1824 = vpop.f32.mrb[0].mxu0
        %v1825 = vadd.f32 %v1618, %v1824
        %v1826 = vpop.f32.mrb[0].mxu0
        %v1827 = vadd.f32 %v1620, %v1826
        %v1828 = vpop.f32.mrb[0].mxu0
        %v1829 = vadd.f32 %v1622, %v1828
        %1830 = vmatprep.mubr.bf16.mxu0 0
        %1831 = vmatmul.mubr.bf16.gmra.mrb[0].mxu0 %v1750
        %v1832 = vpop.f32.mrb[0].mxu0
        %v1833 = vadd.f32 %v1626, %v1832
        %v1834 = vpop.f32.mrb[0].mxu0
        %v1835 = vadd.f32 %v1628, %v1834
        %v1836 = vpop.f32.mrb[0].mxu0
        %v1837 = vadd.f32 %v1630, %v1836
        %v1838 = vpop.f32.mrb[0].mxu0
        %v1839 = vadd.f32 %v1632, %v1838
        %1840 = vmatprep.mubr.bf16.mxu0 0
        %1841 = vmatmul.mubr.bf16.gmra.mrb[0].mxu0 %v1752
        %v1842 = vpop.f32.mrb[0].mxu0
        %v1843 = vadd.f32 %v1636, %v1842
        %v1844 = vpop.f32.mrb[0].mxu0
        %v1845 = vadd.f32 %v1638, %v1844
        %v1846 = vpop.f32.mrb[0].mxu0
        %v1847 = vadd.f32 %v1640, %v1846
        %v1848 = vpop.f32.mrb[0].mxu0
        %v1849 = vadd.f32 %v1642, %v1848
        %1850 = vmatprep.mubr.bf16.mxu0 0
        %1851 = vmatmul.mubr.bf16.gmra.mrb[0].mxu0 %v1754
        %v1852 = vpop.f32.mrb[0].mxu0
        %v1853 = vadd.f32 %v1646, %v1852
        %v1854 = vpop.f32.mrb[0].mxu0
        %v1855 = vadd.f32 %v1648, %v1854
        %v1856 = vpop.f32.mrb[0].mxu0
        %v1857 = vadd.f32 %v1650, %v1856
        %v1858 = vpop.f32.mrb[0].mxu0
        %v1859 = vadd.f32 %v1652, %v1858
        %1860 = vmatprep.mubr.bf16.mxu0 0
        %1861 = vmatmul.mubr.bf16.gmra.mrb[0].mxu0 %v1756
        %v1862 = vpop.f32.mrb[0].mxu0
        %v1863 = vadd.f32 %v1656, %v1862
        %v1864 = vpop.f32.mrb[0].mxu0
        %v1865 = vadd.f32 %v1658, %v1864
        %v1866 = vpop.f32.mrb[0].mxu0
        %v1867 = vadd.f32 %v1660, %v1866
        %v1868 = vpop.f32.mrb[0].mxu0
        %v1869 = vadd.f32 %v1662, %v1868
        %1870 = vmatprep.mubr.bf16.mxu0 0
        %1871 = vmatmul.mubr.bf16.gmra.mrb[0].mxu0 %v1758
        %v1872 = vpop.f32.mrb[0].mxu0
        %v1873 = vadd.f32 %v1666, %v1872
        %v1874 = vpop.f32.mrb[0].mxu0
        %v1875 = vadd.f32 %v1668, %v1874
        %v1876 = vpop.f32.mrb[0].mxu0
        %v1877 = vadd.f32 %v1670, %v1876
        %v1878 = vpop.f32.mrb[0].mxu0
        %v1879 = vadd.f32 %v1672, %v1878
        %1880 = vmatprep.mubr.bf16.mxu0 0
        %1881 = vmatmul.mubr.bf16.gmra.mrb[0].mxu0 %v1760
        %v1882 = vpop.f32.mrb[0].mxu0
        %v1883 = vadd.f32 %v1676, %v1882
        %v1884 = vpop.f32.mrb[0].mxu0
        %v1885 = vadd.f32 %v1678, %v1884
        %v1886 = vpop.f32.mrb[0].mxu0
        %v1887 = vadd.f32 %v1680, %v1886
        %v1888 = vpop.f32.mrb[0].mxu0
        %v1889 = vadd.f32 %v1682, %v1888
        %1890 = vmatprep.mubr.bf16.mxu0 0
        %1891 = vmatmul.mubr.bf16.gmra.mrb[0].mxu0 %v1762
        %v1892 = vpop.f32.mrb[0].mxu0
        %v1893 = vadd.f32 %v1686, %v1892
        %v1894 = vpop.f32.mrb[0].mxu0
        %v1895 = vadd.f32 %v1688, %v1894
        %v1896 = vpop.f32.mrb[0].mxu0
        %v1897 = vadd.f32 %v1690, %v1896
        %v1898 = vpop.f32.mrb[0].mxu0
        %v1899 = vadd.f32 %v1692, %v1898
        %1900 = vmatprep.mubr.bf16.mxu0 0
        %1901 = vmatmul.mubr.bf16.gmra.mrb[0].mxu0 %v1764
        %v1902 = vpop.f32.mrb[0].mxu0
        %v1903 = vadd.f32 %v1696, %v1902
        %v1904 = vpop.f32.mrb[0].mxu0
        %v1905 = vadd.f32 %v1698, %v1904
        %v1906 = vpop.f32.mrb[0].mxu0
        %v1907 = vadd.f32 %v1700, %v1906
        %v1908 = vpop.f32.mrb[0].mxu0
        %v1909 = vadd.f32 %v1702, %v1908
        %1910 = vmatprep.mubr.bf16.mxu0 0
        %1911 = vmatmul.mubr.bf16.gmra.mrb[0].mxu0 %v1766
        %v1912 = vpop.f32.mrb[0].mxu0
        %v1913 = vadd.f32 %v1706, %v1912
        %v1914 = vpop.f32.mrb[0].mxu0
        %v1915 = vadd.f32 %v1708, %v1914
        %v1916 = vpop.f32.mrb[0].mxu0
        %v1917 = vadd.f32 %v1710, %v1916
        %v1918 = vpop.f32.mrb[0].mxu0
        %v1919 = vadd.f32 %v1712, %v1918
        %1920 = vdwg.mxu0
        %s1921 = sadd.s32 %s863, 2
        %s1922 = smul.u32 %s1921, 3
        %s1923 = smul.addr %s1922, 4
        %s1924 = scalar_lea.vmem [#allocation2], %s1923
        %v1925 = vld [vmem:[%s1924] sm:$0xf]
        %v1926 = vld [vmem:[%s1924 + $0x4] sm:$0xf]
        %v1927 = vld [vmem:[%s1924 + $0x8] sm:$0xf]
        %v1928 = vld [vmem:[%s1924 + $0xc] sm:$0xf]
        %v1929 = vld [vmem:[%s1924 + $0x10] sm:$0xf]
        %v1930 = vld [vmem:[%s1924 + $0x14] sm:$0xf]
        %v1931 = vld [vmem:[%s1924 + $0x18] sm:$0xf]
        %v1932 = vld [vmem:[%s1924 + $0x1c] sm:$0xf]
        %v1933 = vld [vmem:[%s1924 + $0x20] sm:$0xf]
        %v1934 = vld [vmem:[%s1924 + $0x24] sm:$0xf]
        %v1935 = vld [vmem:[%s1924 + $0x28] sm:$0xf]
        %v1936 = vld [vmem:[%s1924 + $0x2c] sm:$0xf]
        %v1937 = vld [vmem:[%s1924 + $0x30] sm:$0xf]
        %v1938 = vld [vmem:[%s1924 + $0x34] sm:$0xf]
        %v1939 = vld [vmem:[%s1924 + $0x38] sm:$0xf]
        %v1940 = vld [vmem:[%s1924 + $0x3c] sm:$0xf]
        %v1941 = vld [vmem:[%s1924 + $0x40] sm:$0xf]
        %v1942 = vld [vmem:[%s1924 + $0x44] sm:$0xf]
        %v1943 = vld [vmem:[%s1924 + $0x48] sm:$0xf]
        %v1944 = vld [vmem:[%s1924 + $0x4c] sm:$0xf]
        %v1945 = vld [vmem:[%s1924 + $0x50] sm:$0xf]
        %v1946 = vld [vmem:[%s1924 + $0x54] sm:$0xf]
        %v1947 = vld [vmem:[%s1924 + $0x58] sm:$0xf]
        %v1948 = vld [vmem:[%s1924 + $0x5c] sm:$0xf]
        %v1949 = vld [vmem:[%s1924 + $0x60] sm:$0xf]
        %v1974 = vunpack.c.l.b16 %v1925
        %v1975 = vunpack.c.l.b16 %v1926
        %v1976 = vunpack.c.l.b16 %v1927
        %v1977 = vunpack.c.l.b16 %v1928
        %v1978 = vunpack.c.l.b16 %v1929
        %v1979 = vunpack.c.l.b16 %v1930
        %v1980 = vunpack.c.l.b16 %v1931
        %v1981 = vunpack.c.l.b16 %v1932
        %v1982 = vunpack.c.l.b16 %v1933
        %v1983 = vunpack.c.l.b16 %v1934
        %v1984 = vunpack.c.l.b16 %v1935
        %v1985 = vunpack.c.l.b16 %v1936
        %v1986 = vunpack.c.l.b16 %v1937
        %v1987 = vunpack.c.l.b16 %v1938
        %v1988 = vunpack.c.l.b16 %v1939
        %v1989 = vunpack.c.l.b16 %v1940
        %v1990 = vunpack.c.l.b16 %v1941
        %v1991 = vunpack.c.l.b16 %v1942
        %v1992 = vunpack.c.l.b16 %v1943
        %v1993 = vunpack.c.l.b16 %v1944
        %v1994 = vunpack.c.l.b16 %v1945
        %v1995 = vunpack.c.l.b16 %v1946
        %v1996 = vunpack.c.l.b16 %v1947
        %v1997 = vunpack.c.l.b16 %v1948
        %v1998 = vpack.c.b16 %v1975, %v1974
        %v1999 = vpack.c.b16 %v1977, %v1976
        %v2000 = vpack.c.b16 %v1979, %v1978
        %v2001 = vpack.c.b16 %v1981, %v1980
        %v2002 = vpack.c.b16 %v1983, %v1982
        %v2003 = vpack.c.b16 %v1985, %v1984
        %v2004 = vpack.c.b16 %v1987, %v1986
        %v2005 = vpack.c.b16 %v1989, %v1988
        %v2006 = vpack.c.b16 %v1991, %v1990
        %v2007 = vpack.c.b16 %v1993, %v1992
        %v2008 = vpack.c.b16 %v1995, %v1994
        %v2009 = vpack.c.b16 %v1997, %v1996
        %v2011 = vunpack.c.l.b16 %v1949
        %v2012 = vpack.c.b16 %v2011, %v2011
        %v2014 = vshrl.u32 %v1998, 16
        %v2016 = vshll.u32 %v1998, 16
        %v2018 = vrot.slane %v2016, 1
        %v2019 = vor.u32 %v2014, %v2018
        %v2021 = vshll.u32 %v1999, 16
        %v2023 = vrot.slane %v2021, 1
        %v2024 = vsel %vm955, %v2019, %v2023
        %v2025 = vshrl.u32 %v1999, 16
        %v2027 = vor.u32 %v2025, %v2023
        %v2029 = vshll.u32 %v2000, 16
        %v2031 = vrot.slane %v2029, 1
        %v2032 = vsel %vm955, %v2027, %v2031
        %v2033 = vshrl.u32 %v2000, 16
        %v2035 = vor.u32 %v2033, %v2031
        %v2037 = vshll.u32 %v2001, 16
        %v2039 = vrot.slane %v2037, 1
        %v2040 = vsel %vm955, %v2035, %v2039
        %v2041 = vshrl.u32 %v2001, 16
        %v2043 = vor.u32 %v2041, %v2039
        %v2045 = vshll.u32 %v2002, 16
        %v2047 = vrot.slane %v2045, 1
        %v2048 = vsel %vm955, %v2043, %v2047
        %v2049 = vshrl.u32 %v2002, 16
        %v2051 = vor.u32 %v2049, %v2047
        %v2053 = vshll.u32 %v2003, 16
        %v2055 = vrot.slane %v2053, 1
        %v2056 = vsel %vm955, %v2051, %v2055
        %v2057 = vshrl.u32 %v2003, 16
        %v2059 = vor.u32 %v2057, %v2055
        %v2061 = vshll.u32 %v2004, 16
        %v2063 = vrot.slane %v2061, 1
        %v2064 = vsel %vm955, %v2059, %v2063
        %v2065 = vshrl.u32 %v2004, 16
        %v2067 = vor.u32 %v2065, %v2063
        %v2069 = vshll.u32 %v2005, 16
        %v2071 = vrot.slane %v2069, 1
        %v2072 = vsel %vm955, %v2067, %v2071
        %v2073 = vshrl.u32 %v2005, 16
        %v2075 = vor.u32 %v2073, %v2071
        %v2077 = vshll.u32 %v2006, 16
        %v2079 = vrot.slane %v2077, 1
        %v2080 = vsel %vm955, %v2075, %v2079
        %v2081 = vshrl.u32 %v2006, 16
        %v2083 = vor.u32 %v2081, %v2079
        %v2085 = vshll.u32 %v2007, 16
        %v2087 = vrot.slane %v2085, 1
        %v2088 = vsel %vm955, %v2083, %v2087
        %v2089 = vshrl.u32 %v2007, 16
        %v2091 = vor.u32 %v2089, %v2087
        %v2093 = vshll.u32 %v2008, 16
        %v2095 = vrot.slane %v2093, 1
        %v2096 = vsel %vm955, %v2091, %v2095
        %v2097 = vshrl.u32 %v2008, 16
        %v2099 = vor.u32 %v2097, %v2095
        %v2101 = vshll.u32 %v2009, 16
        %v2103 = vrot.slane %v2101, 1
        %v2104 = vsel %vm955, %v2099, %v2103
        %v2105 = vshrl.u32 %v2009, 16
        %v2107 = vor.u32 %v2105, %v2103
        %v2109 = vshll.u32 %v2012, 16
        %v2111 = vrot.slane %v2109, 1
        %v2112 = vsel %vm955, %v2107, %v2111
        %2113 = vrot.lane.b32.xlu0 %v2024, 16
        %v2114 = vpop.permute.xlu0 %2113
        %2115 = vrot.lane.b32.xlu0 %v2032, 16
        %v2116 = vpop.permute.xlu0 %2115
        %2117 = vrot.lane.b32.xlu0 %v2040, 16
        %v2118 = vpop.permute.xlu0 %2117
        %2119 = vrot.lane.b32.xlu0 %v2048, 16
        %v2120 = vpop.permute.xlu0 %2119
        %2121 = vrot.lane.b32.xlu0 %v2056, 16
        %v2122 = vpop.permute.xlu0 %2121
        %2123 = vrot.lane.b32.xlu0 %v2064, 16
        %v2124 = vpop.permute.xlu0 %2123
        %2125 = vrot.lane.b32.xlu0 %v2072, 16
        %v2126 = vpop.permute.xlu0 %2125
        %2127 = vrot.lane.b32.xlu0 %v2080, 16
        %v2128 = vpop.permute.xlu0 %2127
        %2129 = vrot.lane.b32.xlu0 %v2088, 16
        %v2130 = vpop.permute.xlu0 %2129
        %2131 = vrot.lane.b32.xlu0 %v2096, 16
        %v2132 = vpop.permute.xlu0 %2131
        %2133 = vrot.lane.b32.xlu0 %v2104, 16
        %v2134 = vpop.permute.xlu0 %2133
        %2135 = vrot.lane.b32.xlu0 %v2112, 16
        %v2136 = vpop.permute.xlu0 %2135
        %v2137 = vrot.slane %v1998, 1
        %v2138 = vrot.slane %v1999, 1
        %v2139 = vsel %vm1080, %v2137, %v2138
        %v2140 = vrot.slane %v2000, 1
        %v2141 = vsel %vm1080, %v2138, %v2140
        %v2142 = vrot.slane %v2001, 1
        %v2143 = vsel %vm1080, %v2140, %v2142
        %v2144 = vrot.slane %v2002, 1
        %v2145 = vsel %vm1080, %v2142, %v2144
        %v2146 = vrot.slane %v2003, 1
        %v2147 = vsel %vm1080, %v2144, %v2146
        %v2148 = vrot.slane %v2004, 1
        %v2149 = vsel %vm1080, %v2146, %v2148
        %v2150 = vrot.slane %v2005, 1
        %v2151 = vsel %vm1080, %v2148, %v2150
        %v2152 = vrot.slane %v2006, 1
        %v2153 = vsel %vm1080, %v2150, %v2152
        %v2154 = vrot.slane %v2007, 1
        %v2155 = vsel %vm1080, %v2152, %v2154
        %v2156 = vrot.slane %v2008, 1
        %v2157 = vsel %vm1080, %v2154, %v2156
        %v2158 = vrot.slane %v2009, 1
        %v2159 = vsel %vm1080, %v2156, %v2158
        %v2160 = vrot.slane %v2012, 1
        %v2161 = vsel %vm1080, %v2158, %v2160
        %2162 = vrot.lane.b32.xlu0 %v2139, 32
        %v2163 = vpop.permute.xlu0 %2162
        %2164 = vrot.lane.b32.xlu0 %v2141, 32
        %v2165 = vpop.permute.xlu0 %2164
        %2166 = vrot.lane.b32.xlu0 %v2143, 32
        %v2167 = vpop.permute.xlu0 %2166
        %2168 = vrot.lane.b32.xlu0 %v2145, 32
        %v2169 = vpop.permute.xlu0 %2168
        %2170 = vrot.lane.b32.xlu0 %v2147, 32
        %v2171 = vpop.permute.xlu0 %2170
        %2172 = vrot.lane.b32.xlu0 %v2149, 32
        %v2173 = vpop.permute.xlu0 %2172
        %2174 = vrot.lane.b32.xlu0 %v2151, 32
        %v2175 = vpop.permute.xlu0 %2174
        %2176 = vrot.lane.b32.xlu0 %v2153, 32
        %v2177 = vpop.permute.xlu0 %2176
        %2178 = vrot.lane.b32.xlu0 %v2155, 32
        %v2179 = vpop.permute.xlu0 %2178
        %2180 = vrot.lane.b32.xlu0 %v2157, 32
        %v2181 = vpop.permute.xlu0 %2180
        %2182 = vrot.lane.b32.xlu0 %v2159, 32
        %v2183 = vpop.permute.xlu0 %2182
        %2184 = vrot.lane.b32.xlu0 %v2161, 32
        %v2185 = vpop.permute.xlu0 %2184
        %v2187 = vsel %vm1130, %v1998, %v2114
        %v2189 = vsel %vm1130, %v1999, %v2116
        %v2191 = vsel %vm1130, %v2000, %v2118
        %v2193 = vsel %vm1130, %v2001, %v2120
        %v2195 = vsel %vm1130, %v2002, %v2122
        %v2197 = vsel %vm1130, %v2003, %v2124
        %v2199 = vsel %vm1130, %v2004, %v2126
        %v2201 = vsel %vm1130, %v2005, %v2128
        %v2203 = vsel %vm1130, %v2006, %v2130
        %v2205 = vsel %vm1130, %v2007, %v2132
        %v2207 = vsel %vm1130, %v2008, %v2134
        %v2209 = vsel %vm1130, %v2009, %v2136
        %v2211 = vsel %vm1155, %v2187, %v2163
        %v2213 = vsel %vm1155, %v2189, %v2165
        %v2215 = vsel %vm1155, %v2191, %v2167
        %v2217 = vsel %vm1155, %v2193, %v2169
        %v2219 = vsel %vm1155, %v2195, %v2171
        %v2221 = vsel %vm1155, %v2197, %v2173
        %v2223 = vsel %vm1155, %v2199, %v2175
        %v2225 = vsel %vm1155, %v2201, %v2177
        %v2227 = vsel %vm1155, %v2203, %v2179
        %v2229 = vsel %vm1155, %v2205, %v2181
        %v2231 = vsel %vm1155, %v2207, %v2183
        %v2233 = vsel %vm1155, %v2209, %v2185
        %s2234 = scalar_lea.vmem [#allocation6], 96
        %v2235 = vld [vmem:[%s2234] sm:$0xff]
        %v2236 = vld [vmem:[%s2234 + $0x8] sm:$0xff]
        %v2237 = vld [vmem:[%s2234 + $0x10] sm:$0xff]
        %v2238 = vld [vmem:[%s2234 + $0x18] sm:$0xff]
        %v2239 = vld [vmem:[%s2234 + $0x20] sm:$0xff]
        %v2240 = vld [vmem:[%s2234 + $0x28] sm:$0xff]
        %v2247 = vunpack.c.l.b16 %v2235
        %v2248 = vunpack.c.h.b16 %v2235
        %v2249 = vunpack.c.l.b16 %v2236
        %v2250 = vunpack.c.h.b16 %v2236
        %v2251 = vunpack.c.l.b16 %v2237
        %v2252 = vunpack.c.h.b16 %v2237
        %v2253 = vunpack.c.l.b16 %v2238
        %v2254 = vunpack.c.h.b16 %v2238
        %v2255 = vunpack.c.l.b16 %v2239
        %v2256 = vunpack.c.h.b16 %v2239
        %v2257 = vunpack.c.l.b16 %v2240
        %v2258 = vunpack.c.h.b16 %v2240
        %v2259 = vpack.c.b16 %v2249, %v2247
        %v2260 = vpack.c.b16 %v2250, %v2248
        %v2261 = vpack.c.b16 %v2253, %v2251
        %v2262 = vpack.c.b16 %v2254, %v2252
        %v2263 = vpack.c.b16 %v2257, %v2255
        %v2264 = vpack.c.b16 %v2258, %v2256
        %v2271 = vsel %vm1536, %v2211, 0
        %v2273 = vsel %vm1536, %v2213, 0
        %v2275 = vsel %vm1536, %v2215, 0
        %v2277 = vsel %vm1536, %v2217, 0
        %v2279 = vsel %vm1536, %v2219, 0
        %v2281 = vsel %vm1536, %v2221, 0
        %v2283 = vsel %vm1536, %v2223, 0
        %v2285 = vsel %vm1536, %v2225, 0
        %v2287 = vsel %vm1536, %v2227, 0
        %v2289 = vsel %vm1536, %v2229, 0
        %v2291 = vsel %vm1536, %v2231, 0
        %v2293 = vsel %vm1536, %v2233, 0
        %2295 = vmatprep.subr.bf16.mxu0 %v2260
        %2296 = vmatpush1.bf16.msra.mxu0 %v2259
        %2297 = vmatprep.subr.bf16.mxu0 %v2262
        %2298 = vmatpush1.bf16.msra.mxu0 %v2261
        %2299 = vmatprep.subr.bf16.mxu0 %v2264
        %2300 = vmatpush1.bf16.msra.mxu0 %v2263
        %2301 = vmatprep.subr.bf16.mxu0 0
        %2302 = vmatpush1.bf16.msra.mxu0 0
        %2303 = vmatprep.subr.bf16.mxu0 0
        %2304 = vmatpush1.bf16.msra.mxu0 0
        %2305 = vmatprep.subr.bf16.mxu0 0
        %2306 = vmatpush1.bf16.msra.mxu0 0
        %2307 = vmatprep.subr.bf16.mxu0 0
        %2308 = vmatpush1.bf16.msra.mxu0 0
        %2309 = vmatprep.subr.bf16.mxu0 0
        %2310 = vmatpush1.bf16.msra.mxu0 0
        %2311 = vmatprep.subr.bf16.mxu0 0
        %2312 = vmatpush1.bf16.msra.mxu0 0
        %2313 = vmatprep.subr.bf16.mxu0 0
        %2314 = vmatpush1.bf16.msra.mxu0 0
        %2315 = vmatprep.subr.bf16.mxu0 0
        %2316 = vmatpush1.bf16.msra.mxu0 0
        %2317 = vmatprep.subr.bf16.mxu0 0
        %2318 = vmatpush1.bf16.msra.mxu0 0
        %2319 = vmatprep.subr.bf16.mxu0 0
        %2320 = vmatpush1.bf16.msra.mxu0 0
        %2321 = vmatprep.subr.bf16.mxu0 0
        %2322 = vmatpush1.bf16.msra.mxu0 0
        %2323 = vmatprep.subr.bf16.mxu0 0
        %2324 = vmatpush1.bf16.msra.mxu0 0
        %2325 = vmatprep.subr.bf16.mxu0 0
        %2326 = vmatpush1.bf16.msra.mxu0 0
        %2327 = vmatprep.mubr.bf16.mxu0 0
        %2328 = vmatmul.mubr.bf16.gmra.mrb[0].mxu0 %v2271
        %v2329 = vpop.f32.mrb[0].mxu0
        %v2330 = vadd.f32 0.0, %v2329
        %v2331 = vpop.f32.mrb[0].mxu0
        %v2332 = vadd.f32 0.0, %v2331
        %v2333 = vpop.f32.mrb[0].mxu0
        %v2334 = vadd.f32 0.0, %v2333
        %v2335 = vpop.f32.mrb[0].mxu0
        %v2336 = vadd.f32 0.0, %v2335
        %2337 = vmatprep.mubr.bf16.mxu0 0
        %2338 = vmatmul.mubr.bf16.gmra.mrb[0].mxu0 %v2273
        %v2339 = vpop.f32.mrb[0].mxu0
        %v2340 = vadd.f32 0.0, %v2339
        %v2341 = vpop.f32.mrb[0].mxu0
        %v2342 = vadd.f32 0.0, %v2341
        %v2343 = vpop.f32.mrb[0].mxu0
        %v2344 = vadd.f32 0.0, %v2343
        %v2345 = vpop.f32.mrb[0].mxu0
        %v2346 = vadd.f32 0.0, %v2345
        %2347 = vmatprep.mubr.bf16.mxu0 0
        %2348 = vmatmul.mubr.bf16.gmra.mrb[0].mxu0 %v2275
        %v2349 = vpop.f32.mrb[0].mxu0
        %v2350 = vadd.f32 0.0, %v2349
        %v2351 = vpop.f32.mrb[0].mxu0
        %v2352 = vadd.f32 0.0, %v2351
        %v2353 = vpop.f32.mrb[0].mxu0
        %v2354 = vadd.f32 0.0, %v2353
        %v2355 = vpop.f32.mrb[0].mxu0
        %v2356 = vadd.f32 0.0, %v2355
        %2357 = vmatprep.mubr.bf16.mxu0 0
        %2358 = vmatmul.mubr.bf16.gmra.mrb[0].mxu0 %v2277
        %v2359 = vpop.f32.mrb[0].mxu0
        %v2360 = vadd.f32 0.0, %v2359
        %v2361 = vpop.f32.mrb[0].mxu0
        %v2362 = vadd.f32 0.0, %v2361
        %v2363 = vpop.f32.mrb[0].mxu0
        %v2364 = vadd.f32 0.0, %v2363
        %v2365 = vpop.f32.mrb[0].mxu0
        %v2366 = vadd.f32 0.0, %v2365
        %2367 = vmatprep.mubr.bf16.mxu0 0
        %2368 = vmatmul.mubr.bf16.gmra.mrb[0].mxu0 %v2279
        %v2369 = vpop.f32.mrb[0].mxu0
        %v2370 = vadd.f32 0.0, %v2369
        %v2371 = vpop.f32.mrb[0].mxu0
        %v2372 = vadd.f32 0.0, %v2371
        %v2373 = vpop.f32.mrb[0].mxu0
        %v2374 = vadd.f32 0.0, %v2373
        %v2375 = vpop.f32.mrb[0].mxu0
        %v2376 = vadd.f32 0.0, %v2375
        %2377 = vmatprep.mubr.bf16.mxu0 0
        %2378 = vmatmul.mubr.bf16.gmra.mrb[0].mxu0 %v2281
        %v2379 = vpop.f32.mrb[0].mxu0
        %v2380 = vadd.f32 0.0, %v2379
        %v2381 = vpop.f32.mrb[0].mxu0
        %v2382 = vadd.f32 0.0, %v2381
        %v2383 = vpop.f32.mrb[0].mxu0
        %v2384 = vadd.f32 0.0, %v2383
        %v2385 = vpop.f32.mrb[0].mxu0
        %v2386 = vadd.f32 0.0, %v2385
        %2387 = vmatprep.mubr.bf16.mxu0 0
        %2388 = vmatmul.mubr.bf16.gmra.mrb[0].mxu0 %v2283
        %v2389 = vpop.f32.mrb[0].mxu0
        %v2390 = vadd.f32 0.0, %v2389
        %v2391 = vpop.f32.mrb[0].mxu0
        %v2392 = vadd.f32 0.0, %v2391
        %v2393 = vpop.f32.mrb[0].mxu0
        %v2394 = vadd.f32 0.0, %v2393
        %v2395 = vpop.f32.mrb[0].mxu0
        %v2396 = vadd.f32 0.0, %v2395
        %2397 = vmatprep.mubr.bf16.mxu0 0
        %2398 = vmatmul.mubr.bf16.gmra.mrb[0].mxu0 %v2285
        %v2399 = vpop.f32.mrb[0].mxu0
        %v2400 = vadd.f32 0.0, %v2399
        %v2401 = vpop.f32.mrb[0].mxu0
        %v2402 = vadd.f32 0.0, %v2401
        %v2403 = vpop.f32.mrb[0].mxu0
        %v2404 = vadd.f32 0.0, %v2403
        %v2405 = vpop.f32.mrb[0].mxu0
        %v2406 = vadd.f32 0.0, %v2405
        %2407 = vmatprep.mubr.bf16.mxu0 0
        %2408 = vmatmul.mubr.bf16.gmra.mrb[0].mxu0 %v2287
        %v2409 = vpop.f32.mrb[0].mxu0
        %v2410 = vadd.f32 0.0, %v2409
        %v2411 = vpop.f32.mrb[0].mxu0
        %v2412 = vadd.f32 0.0, %v2411
        %v2413 = vpop.f32.mrb[0].mxu0
        %v2414 = vadd.f32 0.0, %v2413
        %v2415 = vpop.f32.mrb[0].mxu0
        %v2416 = vadd.f32 0.0, %v2415
        %2417 = vmatprep.mubr.bf16.mxu0 0
        %2418 = vmatmul.mubr.bf16.gmra.mrb[0].mxu0 %v2289
        %v2419 = vpop.f32.mrb[0].mxu0
        %v2420 = vadd.f32 0.0, %v2419
        %v2421 = vpop.f32.mrb[0].mxu0
        %v2422 = vadd.f32 0.0, %v2421
        %v2423 = vpop.f32.mrb[0].mxu0
        %v2424 = vadd.f32 0.0, %v2423
        %v2425 = vpop.f32.mrb[0].mxu0
        %v2426 = vadd.f32 0.0, %v2425
        %2427 = vmatprep.mubr.bf16.mxu0 0
        %2428 = vmatmul.mubr.bf16.gmra.mrb[0].mxu0 %v2291
        %v2429 = vpop.f32.mrb[0].mxu0
        %v2430 = vadd.f32 0.0, %v2429
        %v2431 = vpop.f32.mrb[0].mxu0
        %v2432 = vadd.f32 0.0, %v2431
        %v2433 = vpop.f32.mrb[0].mxu0
        %v2434 = vadd.f32 0.0, %v2433
        %v2435 = vpop.f32.mrb[0].mxu0
        %v2436 = vadd.f32 0.0, %v2435
        %2437 = vmatprep.mubr.bf16.mxu0 0
        %2438 = vmatmul.mubr.bf16.gmra.mrb[0].mxu0 %v2293
        %v2439 = vpop.f32.mrb[0].mxu0
        %v2440 = vadd.f32 0.0, %v2439
        %v2441 = vpop.f32.mrb[0].mxu0
        %v2442 = vadd.f32 0.0, %v2441
        %v2443 = vpop.f32.mrb[0].mxu0
        %v2444 = vadd.f32 0.0, %v2443
        %v2445 = vpop.f32.mrb[0].mxu0
        %v2446 = vadd.f32 0.0, %v2445
        %2447 = vdwg.mxu0
        %v2448 = vadd.f32 %v1803, %v2330
        %v2449 = vadd.f32 %v1805, %v2332
        %v2450 = vadd.f32 %v1807, %v2334
        %v2451 = vadd.f32 %v1809, %v2336
        %v2452 = vadd.f32 %v1813, %v2340
        %v2453 = vadd.f32 %v1815, %v2342
        %v2454 = vadd.f32 %v1817, %v2344
        %v2455 = vadd.f32 %v1819, %v2346
        %v2456 = vadd.f32 %v1823, %v2350
        %v2457 = vadd.f32 %v1825, %v2352
        %v2458 = vadd.f32 %v1827, %v2354
        %v2459 = vadd.f32 %v1829, %v2356
        %v2460 = vadd.f32 %v1833, %v2360
        %v2461 = vadd.f32 %v1835, %v2362
        %v2462 = vadd.f32 %v1837, %v2364
        %v2463 = vadd.f32 %v1839, %v2366
        %v2464 = vadd.f32 %v1843, %v2370
        %v2465 = vadd.f32 %v1845, %v2372
        %v2466 = vadd.f32 %v1847, %v2374
        %v2467 = vadd.f32 %v1849, %v2376
        %v2468 = vadd.f32 %v1853, %v2380
        %v2469 = vadd.f32 %v1855, %v2382
        %v2470 = vadd.f32 %v1857, %v2384
        %v2471 = vadd.f32 %v1859, %v2386
        %v2472 = vadd.f32 %v1863, %v2390
        %v2473 = vadd.f32 %v1865, %v2392
        %v2474 = vadd.f32 %v1867, %v2394
        %v2475 = vadd.f32 %v1869, %v2396
        %v2476 = vadd.f32 %v1873, %v2400
        %v2477 = vadd.f32 %v1875, %v2402
        %v2478 = vadd.f32 %v1877, %v2404
        %v2479 = vadd.f32 %v1879, %v2406
        %v2480 = vadd.f32 %v1883, %v2410
        %v2481 = vadd.f32 %v1885, %v2412
        %v2482 = vadd.f32 %v1887, %v2414
        %v2483 = vadd.f32 %v1889, %v2416
        %v2484 = vadd.f32 %v1893, %v2420
        %v2485 = vadd.f32 %v1895, %v2422
        %v2486 = vadd.f32 %v1897, %v2424
        %v2487 = vadd.f32 %v1899, %v2426
        %v2488 = vadd.f32 %v1903, %v2430
        %v2489 = vadd.f32 %v1905, %v2432
        %v2490 = vadd.f32 %v1907, %v2434
        %v2491 = vadd.f32 %v1909, %v2436
        %v2492 = vadd.f32 %v1913, %v2440
        %v2493 = vadd.f32 %v1915, %v2442
        %v2494 = vadd.f32 %v1917, %v2444
        %v2495 = vadd.f32 %v1919, %v2446
        %v2497 = vlaneseq
        %v2498 = vshrl.u32 %v2497, 7
        %v2499 = vsub.s32 0, %v2498
        %v2500 = vrot.slane %v862, %v2499
        %v2501 = vlaneseq
        %v2502 = vshrl.u32 %v2501, 7
        %v2503 = vsub.s32 1, %v2502
        %v2504 = vrot.slane %v862, %v2503
        %v2507 = vadd.f32 %v2448, %v2500
        %v2508 = vadd.f32 %v2449, %v2504
        %v2509 = vadd.f32 %v2450, %v2500
        %v2510 = vadd.f32 %v2451, %v2504
        %v2511 = vadd.f32 %v2452, %v2500
        %v2512 = vadd.f32 %v2453, %v2504
        %v2513 = vadd.f32 %v2454, %v2500
        %v2514 = vadd.f32 %v2455, %v2504
        %v2515 = vadd.f32 %v2456, %v2500
        %v2516 = vadd.f32 %v2457, %v2504
        %v2517 = vadd.f32 %v2458, %v2500
        %v2518 = vadd.f32 %v2459, %v2504
        %v2519 = vadd.f32 %v2460, %v2500
        %v2520 = vadd.f32 %v2461, %v2504
        %v2521 = vadd.f32 %v2462, %v2500
        %v2522 = vadd.f32 %v2463, %v2504
        %v2523 = vadd.f32 %v2464, %v2500
        %v2524 = vadd.f32 %v2465, %v2504
        %v2525 = vadd.f32 %v2466, %v2500
        %v2526 = vadd.f32 %v2467, %v2504
        %v2527 = vadd.f32 %v2468, %v2500
        %v2528 = vadd.f32 %v2469, %v2504
        %v2529 = vadd.f32 %v2470, %v2500
        %v2530 = vadd.f32 %v2471, %v2504
        %v2531 = vadd.f32 %v2472, %v2500
        %v2532 = vadd.f32 %v2473, %v2504
        %v2533 = vadd.f32 %v2474, %v2500
        %v2534 = vadd.f32 %v2475, %v2504
        %v2535 = vadd.f32 %v2476, %v2500
        %v2536 = vadd.f32 %v2477, %v2504
        %v2537 = vadd.f32 %v2478, %v2500
        %v2538 = vadd.f32 %v2479, %v2504
        %v2539 = vadd.f32 %v2480, %v2500
        %v2540 = vadd.f32 %v2481, %v2504
        %v2541 = vadd.f32 %v2482, %v2500
        %v2542 = vadd.f32 %v2483, %v2504
        %v2543 = vadd.f32 %v2484, %v2500
        %v2544 = vadd.f32 %v2485, %v2504
        %v2545 = vadd.f32 %v2486, %v2500
        %v2546 = vadd.f32 %v2487, %v2504
        %v2547 = vadd.f32 %v2488, %v2500
        %v2548 = vadd.f32 %v2489, %v2504
        %v2549 = vadd.f32 %v2490, %v2500
        %v2550 = vadd.f32 %v2491, %v2504
        %v2551 = vadd.f32 %v2492, %v2500
        %v2552 = vadd.f32 %v2493, %v2504
        %v2553 = vadd.f32 %v2494, %v2500
        %v2554 = vadd.f32 %v2495, %v2504
        %v2555 = vmax.f32 %v2507, 0.0
        %v2556 = vmax.f32 %v2508, 0.0
        %v2557 = vmax.f32 %v2509, 0.0
        %v2558 = vmax.f32 %v2510, 0.0
        %v2559 = vmax.f32 %v2511, 0.0
        %v2560 = vmax.f32 %v2512, 0.0
        %v2561 = vmax.f32 %v2513, 0.0
        %v2562 = vmax.f32 %v2514, 0.0
        %v2563 = vmax.f32 %v2515, 0.0
        %v2564 = vmax.f32 %v2516, 0.0
        %v2565 = vmax.f32 %v2517, 0.0
        %v2566 = vmax.f32 %v2518, 0.0
        %v2567 = vmax.f32 %v2519, 0.0
        %v2568 = vmax.f32 %v2520, 0.0
        %v2569 = vmax.f32 %v2521, 0.0
        %v2570 = vmax.f32 %v2522, 0.0
        %v2571 = vmax.f32 %v2523, 0.0
        %v2572 = vmax.f32 %v2524, 0.0
        %v2573 = vmax.f32 %v2525, 0.0
        %v2574 = vmax.f32 %v2526, 0.0
        %v2575 = vmax.f32 %v2527, 0.0
        %v2576 = vmax.f32 %v2528, 0.0
        %v2577 = vmax.f32 %v2529, 0.0
        %v2578 = vmax.f32 %v2530, 0.0
        %v2579 = vmax.f32 %v2531, 0.0
        %v2580 = vmax.f32 %v2532, 0.0
        %v2581 = vmax.f32 %v2533, 0.0
        %v2582 = vmax.f32 %v2534, 0.0
        %v2583 = vmax.f32 %v2535, 0.0
        %v2584 = vmax.f32 %v2536, 0.0
        %v2585 = vmax.f32 %v2537, 0.0
        %v2586 = vmax.f32 %v2538, 0.0
        %v2587 = vmax.f32 %v2539, 0.0
        %v2588 = vmax.f32 %v2540, 0.0
        %v2589 = vmax.f32 %v2541, 0.0
        %v2590 = vmax.f32 %v2542, 0.0
        %v2591 = vmax.f32 %v2543, 0.0
        %v2592 = vmax.f32 %v2544, 0.0
        %v2593 = vmax.f32 %v2545, 0.0
        %v2594 = vmax.f32 %v2546, 0.0
        %v2595 = vmax.f32 %v2547, 0.0
        %v2596 = vmax.f32 %v2548, 0.0
        %v2597 = vmax.f32 %v2549, 0.0
        %v2598 = vmax.f32 %v2550, 0.0
        %v2599 = vmax.f32 %v2551, 0.0
        %v2600 = vmax.f32 %v2552, 0.0
        %v2601 = vmax.f32 %v2553, 0.0
        %v2602 = vmax.f32 %v2554, 0.0
        %v2603 = vpack.c.bf16 %v2557, %v2555
        %v2604 = vpack.c.bf16 %v2558, %v2556
        %v2605 = vpack.c.bf16 %v2561, %v2559
        %v2606 = vpack.c.bf16 %v2562, %v2560
        %v2607 = vpack.c.bf16 %v2565, %v2563
        %v2608 = vpack.c.bf16 %v2566, %v2564
        %v2609 = vpack.c.bf16 %v2569, %v2567
        %v2610 = vpack.c.bf16 %v2570, %v2568
        %v2611 = vpack.c.bf16 %v2573, %v2571
        %v2612 = vpack.c.bf16 %v2574, %v2572
        %v2613 = vpack.c.bf16 %v2577, %v2575
        %v2614 = vpack.c.bf16 %v2578, %v2576
        %v2615 = vpack.c.bf16 %v2581, %v2579
        %v2616 = vpack.c.bf16 %v2582, %v2580
        %v2617 = vpack.c.bf16 %v2585, %v2583
        %v2618 = vpack.c.bf16 %v2586, %v2584
        %v2619 = vpack.c.bf16 %v2589, %v2587
        %v2620 = vpack.c.bf16 %v2590, %v2588
        %v2621 = vpack.c.bf16 %v2593, %v2591
        %v2622 = vpack.c.bf16 %v2594, %v2592
        %v2623 = vpack.c.bf16 %v2597, %v2595
        %v2624 = vpack.c.bf16 %v2598, %v2596
        %v2625 = vpack.c.bf16 %v2601, %v2599
        %v2626 = vpack.c.bf16 %v2602, %v2600
        %v2651 = vunpack.c.l.b16 %v2603
        %v2652 = vunpack.c.l.b16 %v2604
        %v2653 = vunpack.c.h.b16 %v2603
        %v2654 = vunpack.c.h.b16 %v2604
        %v2655 = vunpack.c.h.b16 %v2605
        %v2656 = vunpack.c.h.b16 %v2606
        %v2657 = vunpack.c.l.b16 %v2607
        %v2658 = vunpack.c.l.b16 %v2608
        %v2659 = vunpack.c.l.b16 %v2609
        %v2660 = vunpack.c.l.b16 %v2610
        %v2661 = vunpack.c.h.b16 %v2609
        %v2662 = vunpack.c.h.b16 %v2610
        %v2663 = vunpack.c.h.b16 %v2611
        %v2664 = vunpack.c.h.b16 %v2612
        %v2665 = vunpack.c.l.b16 %v2613
        %v2666 = vunpack.c.l.b16 %v2614
        %v2667 = vunpack.c.l.b16 %v2615
        %v2668 = vunpack.c.l.b16 %v2616
        %v2669 = vunpack.c.h.b16 %v2615
        %v2670 = vunpack.c.h.b16 %v2616
        %v2671 = vunpack.c.h.b16 %v2617
        %v2672 = vunpack.c.h.b16 %v2618
        %v2673 = vunpack.c.l.b16 %v2619
        %v2674 = vunpack.c.l.b16 %v2620
        %v2675 = vunpack.c.l.b16 %v2621
        %v2676 = vunpack.c.l.b16 %v2622
        %v2677 = vunpack.c.h.b16 %v2621
        %v2678 = vunpack.c.h.b16 %v2622
        %v2679 = vunpack.c.h.b16 %v2623
        %v2680 = vunpack.c.h.b16 %v2624
        %v2681 = vunpack.c.l.b16 %v2625
        %v2682 = vunpack.c.l.b16 %v2626
        %v2683 = vpack.c.b16 %v2652, %v2651
        %v2684 = vpack.c.b16 %v2654, %v2653
        %v2685 = vpack.c.b16 %v2656, %v2655
        %v2686 = vpack.c.b16 %v2658, %v2657
        %v2687 = vpack.c.b16 %v2660, %v2659
        %v2688 = vpack.c.b16 %v2662, %v2661
        %v2689 = vpack.c.b16 %v2664, %v2663
        %v2690 = vpack.c.b16 %v2666, %v2665
        %v2691 = vpack.c.b16 %v2668, %v2667
        %v2692 = vpack.c.b16 %v2670, %v2669
        %v2693 = vpack.c.b16 %v2672, %v2671
        %v2694 = vpack.c.b16 %v2674, %v2673
        %v2695 = vpack.c.b16 %v2676, %v2675
        %v2696 = vpack.c.b16 %v2678, %v2677
        %v2697 = vpack.c.b16 %v2680, %v2679
        %v2698 = vpack.c.b16 %v2682, %v2681
        %2715 = vst [vmem:[%s248] sm:$0xff] %v2683
        %2716 = vst [vmem:[%s248 + $0x8] sm:$0xff] %v2684
        %2717 = vst [vmem:[%s248 + $0x10] sm:$0xff] %v2685
        %2718 = vst [vmem:[%s248 + $0x18] sm:$0xff] %v2686
        %2719 = vst [vmem:[%s248 + $0x20] sm:$0xff] %v2687
        %2720 = vst [vmem:[%s248 + $0x28] sm:$0xff] %v2688
        %2721 = vst [vmem:[%s248 + $0x30] sm:$0xff] %v2689
        %2722 = vst [vmem:[%s248 + $0x38] sm:$0xff] %v2690
        %2723 = vst [vmem:[%s248 + $0x40] sm:$0xff] %v2691
        %2724 = vst [vmem:[%s248 + $0x48] sm:$0xff] %v2692
        %2725 = vst [vmem:[%s248 + $0x50] sm:$0xff] %v2693
        %2726 = vst [vmem:[%s248 + $0x58] sm:$0xff] %v2694
        %2727 = vst [vmem:[%s248 + $0x60] sm:$0xff] %v2695
        %2728 = vst [vmem:[%s248 + $0x68] sm:$0xff] %v2696
        %2729 = vst [vmem:[%s248 + $0x70] sm:$0xff] %v2697
        %2730 = vst [vmem:[%s248 + $0x78] sm:$0xff] %v2698
        %s2731 = sand.u32 %s130, 1
        %s2732 = scalar_lea.sflag [#allocation5], %s2731
        %s2733 = sand.u32 %s130, 1
        %s2734 = smul.addr %s2733, 128
        %s2735 = scalar_lea.vmem [#allocation8], %s2734
        // Predicated region
        $region45: #{tpu_custom_call.1} parent=31 // pred_check
          %p2736 = pneg %p140
        $region46: #{tpu_custom_call.1} parent=31 // pred_check_branch
          %2738 = sbr.rel (%p2736) target = $region48
        $region47: #{tpu_custom_call.1} parent=31 // pred_region
          %s2739 = smul.u32 8, %s28
          %s2740 = smul.u32 2, %s27
          %s2742 = ssub.s32 2048, 2048
          %2743 = vsyncadd %s2732, %s2742
          %s2744 = smul.addr %s2739, 4
          %s2745 = sadd.s32 %s2740, %s2744
          %s2746 = smul.addr %s26, 64
          %s2747 = sadd.s32 %s2745, %s2746
          %s2748 = smul.addr %s2747, 64
          %s2749 = scalar_lea.hbm %s3, %s2748
          %s2750 = sshll.u32 %s2735, 4
          %s2751 = int_to_ptr.vmem [resolvable:$true] %s2750
          %2756 = dma.vmem_to_hbm [thread:$0]  %s2751, 2048, %s2749, %s2732, 128, 128, 8
        $region48: #{tpu_custom_call.1} parent=31 // pred_fallthru
          _
      $region32: #{tpu_custom_call.1} parent=5 // pred_fallthru
        _
      %p2757 = scmp.le.s32.totalorder 2, %s16
      // Predicated region
      $region49: #{tpu_custom_call.1} parent=5 // pred_check
        %p2758 = pneg %p2757
      $region50: #{tpu_custom_call.1} parent=5 // pred_check_branch
        %2760 = sbr.rel (%p2758) target = $region52
      $region51: #{tpu_custom_call.1} parent=5 // pred_region
        %s2761 = ssub.s32 %s16, 2
        // Predicated region
        $region53: #{tpu_custom_call.1} parent=51 // pred_check
          %p2762 = pneg %p146
        $region54: #{tpu_custom_call.1} parent=51 // pred_check_branch
          %2764 = sbr.rel (%p2762) target = $region56
        $region55: #{tpu_custom_call.1} parent=51 // pred_region
          %s2765 = sand.u32 %s131, 1
          %s2766 = scalar_lea.sflag [#allocation5], %s2765
          %s2767 = sand.u32 %s131, 1
          %s2768 = smul.addr %s2767, 128
          %s2769 = scalar_lea.vmem [#allocation8], %s2768
          %2770 = dma.done %s2766, 2048
        $region56: #{tpu_custom_call.1} parent=51 // pred_fallthru
          _
      $region52: #{tpu_custom_call.1} parent=5 // pred_fallthru
        _
    $region6: #{tpu_custom_call.1} parent=1 // loop_footer
      %s20 = sadd.s32 1, %s16
    $region7: #{tpu_custom_call.1} parent=1 // loop_footer_branch
      %15 = sbr.rel target = $region3
    $region8: #{tpu_custom_call.1} parent=1 // loop_exit
      _
    %2771 = vsyncpa [#allocation4], 1
    %s2772 = scalar_lea.sflag [#allocation4], 1
    %2773 = vsyncpa %s2772, 1
    %2774 = vsyncpa [#allocation7], 1
    %2775 = vsyncpa [#allocation5], 1
    %s2776 = scalar_lea.sflag [#allocation5], 1
    %2777 = vsyncpa %s2776, 1

</llo_original>
